<compile_context>
chip_gen: v7x
topology: tpu7x:2x2x1
jax: 0.10.0
libtpu: 0.0.40
codegen_flags: <defaults>
</compile_context>

<pallas_src>
import numpy as np
import jax
import jax.numpy as jnp
from jax.experimental import pallas as pl
from jax.experimental.pallas import tpu as pltpu

C = 32        # channels (depthwise: groups == in == out == 32)
K = 10        # ConvTranspose2d kernel size
KP = K // 2   # polyphase taps per output phase (= 5)
STRIDE = 2
PAD = 5
EDGE = (K - 1 - PAD) // STRIDE   # = 2 : spatial padding of the un-stuffed input


def _dwconvt_hardsig_kernel(xp_ref, w_ref, b_ref, o_ref):
    """One output-row-parity phase (r = program_id(0)) per grid step.

    xp_ref: (Hp, Wp, BC)        padded input, batch folded into lanes (shared)
    w_ref : (1, 2, KP, KP, BC)  flipped weights for this row phase, both col phases
    b_ref : (1, BC)             bias broadcast over batch lanes
    o_ref : (1, 2, Hq, Wq, BC)  phase outputs; (r, s, q, p) -> full[2q+r, 2p+s]
    """
    r = pl.program_id(0)
    hq = o_ref.shape[2]
    wq = o_ref.shape[3]
    bc = o_ref.shape[4]

    bias = b_ref[0, :]                               # loaded once per step
    for s in range(2):                               # column parity (static)
        w = w_ref[0, s]                              # (KP, KP, BC), loaded once
        acc = jnp.zeros((hq, wq, bc), jnp.float32)
        for m in range(KP):                          # 5x5 taps, statically unrolled
            for n in range(KP):
                # dynamic start only on the leading (non-tiled) dim; sublane
                # start (s + n) and lane slice are static.
                tap = xp_ref[pl.ds(r + m, hq), pl.ds(s + n, wq), :]
                acc = acc + tap * w[m, n, :]
        # fused hardsigmoid epilogue: clamp(acc + bias + 3, 0, 6) / 6
        y = jnp.clip(acc + bias + 3.0, 0.0, 6.0) * (1.0 / 6.0)
        o_ref[0, s] = y.astype(o_ref.dtype)


def depthwise_convtranspose_hardsigmoid(x_nchw, weight, bias):
    """x_nchw: (B, C, H, W) f32; weight: (C, 1, K, K); bias: (C,). Returns NCHW."""
    x_nchw = jnp.asarray(x_nchw, jnp.float32)
    B, Cin, H, W = x_nchw.shape
    assert Cin == C
    Hq, Wq = H - 1, W - 1            # per-phase output extent
    Ho, Wo = 2 * Hq, 2 * Wq          # == (H-1)*STRIDE - 2*PAD + K
    BC = B * C
    Hp, Wp = H + 2 * EDGE, W + 2 * EDGE

    # ---- glue: fold batch into lanes + pad (no zero-stuffing, no NHWC round trip)
    x_hwbc = jnp.transpose(x_nchw, (2, 3, 0, 1)).reshape(H, W, BC)
    xp = jnp.pad(x_hwbc, ((EDGE, EDGE), (EDGE, EDGE), (0, 0)))         # (Hp, Wp, BC)

    # ---- flipped weights, broadcast over batch lanes, split into 2x2 phases
    wf = weight[:, 0, ::-1, ::-1]                                      # (C, K, K)
    w_kkc = jnp.transpose(wf, (1, 2, 0))                               # (K, K, C)
    w_kkbc = jnp.broadcast_to(w_kkc[:, :, None, :], (K, K, B, C)).reshape(K, K, BC)
    # w_phases[r, s, m, n, :] = flipped_w[r + 2m, s + 2n, :]
    w_phases = jnp.transpose(w_kkbc.reshape(KP, 2, KP, 2, BC), (1, 3, 0, 2, 4))
    b_bc = jnp.broadcast_to(bias[None, :], (B, C)).reshape(1, BC)

    out_phases = pl.pallas_call(
        _dwconvt_hardsig_kernel,
        out_shape=jax.ShapeDtypeStruct((2, 2, Hq, Wq, BC), jnp.float32),
        grid_spec=pltpu.PrefetchScalarGridSpec(
            num_scalar_prefetch=0,
            grid=(2,),                                     # output-row parity r
            in_specs=[
                pl.BlockSpec((Hp, Wp, BC), lambda r: (0, 0, 0)),
                pl.BlockSpec((1, 2, KP, KP, BC), lambda r: (r, 0, 0, 0, 0)),
                pl.BlockSpec((1, BC), lambda r: (0, 0)),
            ],
            out_specs=pl.BlockSpec((1, 2, Hq, Wq, BC), lambda r: (r, 0, 0, 0, 0)),
        ),
        compiler_params=pltpu.CompilerParams(
            dimension_semantics=("parallel",)),
    )(xp, w_phases, b_bc)

    # ---- interleave phases & unfold batch: (r, s, q, p, b, c) -> (b, c, 2q+r, 2p+s)
    out = jnp.transpose(out_phases.reshape(2, 2, Hq, Wq, B, C), (4, 5, 2, 0, 3, 1))
    return out.reshape(B, C, Ho, Wo)


def _reference_numpy(x, w, b):
    """Direct scatter reference for depthwise ConvTranspose2d + hardsigmoid (NCHW)."""
    B, Cc, H, W = x.shape
    Ho = (H - 1) * STRIDE - 2 * PAD + K
    Wo = (W - 1) * STRIDE - 2 * PAD + K
    y = np.zeros((B, Cc, Ho, Wo), np.float32)
    for ih in range(H):
        for iw in range(W):
            for kh in range(K):
                for kw in range(K):
                    oh = ih * STRIDE - PAD + kh
                    ow = iw * STRIDE - PAD + kw
                    if 0 <= oh < Ho and 0 <= ow < Wo:
                        y[:, :, oh, ow] += x[:, :, ih, iw] * w[:, 0, kh, kw][None, :]
    y += b[None, :, None, None]
    return np.clip(y + 3.0, 0.0, 6.0) / 6.0


if __name__ == "__main__":
    key = jax.random.PRNGKey(0)
    kx, kw, kb = jax.random.split(key, 3)

    # small deterministic inputs (module implies 32 channels)
    x = jax.random.normal(kx, (2, C, 8, 8), dtype=jnp.float32)
    weight = jax.random.normal(kw, (C, 1, K, K), dtype=jnp.float32) * 0.1
    bias = jax.random.normal(kb, (C,), dtype=jnp.float32) * 0.1

    fwd = jax.jit(depthwise_convtranspose_hardsigmoid)
    out = fwd(x, weight, bias)
    out = jax.block_until_ready(out)

    ref = _reference_numpy(np.asarray(x), np.asarray(weight), np.asarray(bias))
    np.testing.assert_allclose(np.asarray(out), ref, rtol=1e-5, atol=1e-5)

    print("KERNEL_OK")
</pallas_src>

<mosaic_0001>
module attributes {stable_mosaic.version = 11 : i64} {
  func.func @_dwconvt_hardsig_kernel(%arg0: i32, %arg1: memref<12x12x64xf32, #tpu.memory_space<vmem>>, %arg2: memref<1x2x5x5x64xf32, #tpu.memory_space<vmem>>, %arg3: memref<1x64xf32, #tpu.memory_space<vmem>>, %arg4: memref<1x2x7x7x64xf32, #tpu.memory_space<vmem>>) attributes {dimension_semantics = [#tpu.dimension_semantics<parallel>], iteration_bounds = array<i64: 2>, scalar_prefetch = 0 : i64, scratch_operands = 0 : i64, tpu.core_type = #tpu.core_type<tc>, window_params = [{pipeline_mode = #tpu.pipeline_mode<synchronous>, transform_indices = @transform_0, window_bounds = array<i64: 12, 12, 64>}, {transform_indices = @transform_1, window_bounds = array<i64: 1, 2, 5, 5, 64>}, {pipeline_mode = #tpu.pipeline_mode<synchronous>, transform_indices = @transform_2, window_bounds = array<i64: 1, 64>}, {transform_indices = @transform_3, window_bounds = array<i64: 1, 2, 7, 7, 64>}]} {
    %c0 = arith.constant 0 : index
    %c0_0 = arith.constant 0 : index
    %0 = vector.load %arg3[%c0, %c0_0] : memref<1x64xf32, #tpu.memory_space<vmem>>, vector<1x64xf32>
    %1 = vector.shape_cast %0 : vector<1x64xf32> to vector<64xf32>
    %c0_1 = arith.constant 0 : index
    %c0_2 = arith.constant 0 : index
    %c0_3 = arith.constant 0 : index
    %c0_4 = arith.constant 0 : index
    %c0_5 = arith.constant 0 : index
    %2 = vector.load %arg2[%c0_1, %c0_2, %c0_3, %c0_4, %c0_5] : memref<1x2x5x5x64xf32, #tpu.memory_space<vmem>>, vector<1x1x5x5x64xf32>
    %3 = vector.shape_cast %2 : vector<1x1x5x5x64xf32> to vector<5x5x64xf32>
    %cst = arith.constant 0.000000e+00 : f32
    %4 = vector.broadcast %cst : f32 to vector<7x7x64xf32>
    %c0_i32 = arith.constant 0 : i32
    %5 = arith.addi %arg0, %c0_i32 : i32
    %6 = arith.index_cast %5 : i32 to index
    %c0_6 = arith.constant 0 : index
    %c0_7 = arith.constant 0 : index
    %7 = vector.load %arg1[%6, %c0_6, %c0_7] : memref<12x12x64xf32, #tpu.memory_space<vmem>>, vector<7x7x64xf32>
    %8 = vector.extract_strided_slice %3 {offsets = [0, 0, 0], sizes = [1, 1, 64], strides = [1, 1, 1]} : vector<5x5x64xf32> to vector<1x1x64xf32>
    %9 = vector.shape_cast %8 : vector<1x1x64xf32> to vector<64xf32>
    %10 = vector.shape_cast %9 : vector<64xf32> to vector<1x1x64xf32>
    %11 = vector.broadcast %10 : vector<1x1x64xf32> to vector<7x7x64xf32>
    %12 = arith.mulf %7, %11 : vector<7x7x64xf32>
    %13 = arith.addf %4, %12 : vector<7x7x64xf32>
    %c0_i32_8 = arith.constant 0 : i32
    %14 = arith.addi %arg0, %c0_i32_8 : i32
    %15 = arith.index_cast %14 : i32 to index
    %c1 = arith.constant 1 : index
    %c0_9 = arith.constant 0 : index
    %16 = vector.load %arg1[%15, %c1, %c0_9] : memref<12x12x64xf32, #tpu.memory_space<vmem>>, vector<7x7x64xf32>
    %17 = vector.extract_strided_slice %3 {offsets = [0, 1, 0], sizes = [1, 1, 64], strides = [1, 1, 1]} : vector<5x5x64xf32> to vector<1x1x64xf32>
    %18 = vector.shape_cast %17 : vector<1x1x64xf32> to vector<64xf32>
    %19 = vector.shape_cast %18 : vector<64xf32> to vector<1x1x64xf32>
    %20 = vector.broadcast %19 : vector<1x1x64xf32> to vector<7x7x64xf32>
    %21 = arith.mulf %16, %20 : vector<7x7x64xf32>
    %22 = arith.addf %13, %21 : vector<7x7x64xf32>
    %c0_i32_10 = arith.constant 0 : i32
    %23 = arith.addi %arg0, %c0_i32_10 : i32
    %24 = arith.index_cast %23 : i32 to index
    %c2 = arith.constant 2 : index
    %c0_11 = arith.constant 0 : index
    %25 = vector.load %arg1[%24, %c2, %c0_11] : memref<12x12x64xf32, #tpu.memory_space<vmem>>, vector<7x7x64xf32>
    %26 = vector.extract_strided_slice %3 {offsets = [0, 2, 0], sizes = [1, 1, 64], strides = [1, 1, 1]} : vector<5x5x64xf32> to vector<1x1x64xf32>
    %27 = vector.shape_cast %26 : vector<1x1x64xf32> to vector<64xf32>
    %28 = vector.shape_cast %27 : vector<64xf32> to vector<1x1x64xf32>
    %29 = vector.broadcast %28 : vector<1x1x64xf32> to vector<7x7x64xf32>
    %30 = arith.mulf %25, %29 : vector<7x7x64xf32>
    %31 = arith.addf %22, %30 : vector<7x7x64xf32>
    %c0_i32_12 = arith.constant 0 : i32
    %32 = arith.addi %arg0, %c0_i32_12 : i32
    %33 = arith.index_cast %32 : i32 to index
    %c3 = arith.constant 3 : index
    %c0_13 = arith.constant 0 : index
    %34 = vector.load %arg1[%33, %c3, %c0_13] : memref<12x12x64xf32, #tpu.memory_space<vmem>>, vector<7x7x64xf32>
    %35 = vector.extract_strided_slice %3 {offsets = [0, 3, 0], sizes = [1, 1, 64], strides = [1, 1, 1]} : vector<5x5x64xf32> to vector<1x1x64xf32>
    %36 = vector.shape_cast %35 : vector<1x1x64xf32> to vector<64xf32>
    %37 = vector.shape_cast %36 : vector<64xf32> to vector<1x1x64xf32>
    %38 = vector.broadcast %37 : vector<1x1x64xf32> to vector<7x7x64xf32>
    %39 = arith.mulf %34, %38 : vector<7x7x64xf32>
    %40 = arith.addf %31, %39 : vector<7x7x64xf32>
    %c0_i32_14 = arith.constant 0 : i32
    %41 = arith.addi %arg0, %c0_i32_14 : i32
    %42 = arith.index_cast %41 : i32 to index
    %c4 = arith.constant 4 : index
    %c0_15 = arith.constant 0 : index
    %43 = vector.load %arg1[%42, %c4, %c0_15] : memref<12x12x64xf32, #tpu.memory_space<vmem>>, vector<7x7x64xf32>
    %44 = vector.extract_strided_slice %3 {offsets = [0, 4, 0], sizes = [1, 1, 64], strides = [1, 1, 1]} : vector<5x5x64xf32> to vector<1x1x64xf32>
    %45 = vector.shape_cast %44 : vector<1x1x64xf32> to vector<64xf32>
    %46 = vector.shape_cast %45 : vector<64xf32> to vector<1x1x64xf32>
    %47 = vector.broadcast %46 : vector<1x1x64xf32> to vector<7x7x64xf32>
    %48 = arith.mulf %43, %47 : vector<7x7x64xf32>
    %49 = arith.addf %40, %48 : vector<7x7x64xf32>
    %c1_i32 = arith.constant 1 : i32
    %50 = arith.addi %arg0, %c1_i32 : i32
    %51 = arith.index_cast %50 : i32 to index
    %c0_16 = arith.constant 0 : index
    %c0_17 = arith.constant 0 : index
    %52 = vector.load %arg1[%51, %c0_16, %c0_17] : memref<12x12x64xf32, #tpu.memory_space<vmem>>, vector<7x7x64xf32>
    %53 = vector.extract_strided_slice %3 {offsets = [1, 0, 0], sizes = [1, 1, 64], strides = [1, 1, 1]} : vector<5x5x64xf32> to vector<1x1x64xf32>
    %54 = vector.shape_cast %53 : vector<1x1x64xf32> to vector<64xf32>
    %55 = vector.shape_cast %54 : vector<64xf32> to vector<1x1x64xf32>
    %56 = vector.broadcast %55 : vector<1x1x64xf32> to vector<7x7x64xf32>
    %57 = arith.mulf %52, %56 : vector<7x7x64xf32>
    %58 = arith.addf %49, %57 : vector<7x7x64xf32>
    %c1_i32_18 = arith.constant 1 : i32
    %59 = arith.addi %arg0, %c1_i32_18 : i32
    %60 = arith.index_cast %59 : i32 to index
    %c1_19 = arith.constant 1 : index
    %c0_20 = arith.constant 0 : index
    %61 = vector.load %arg1[%60, %c1_19, %c0_20] : memref<12x12x64xf32, #tpu.memory_space<vmem>>, vector<7x7x64xf32>
    %62 = vector.extract_strided_slice %3 {offsets = [1, 1, 0], sizes = [1, 1, 64], strides = [1, 1, 1]} : vector<5x5x64xf32> to vector<1x1x64xf32>
    %63 = vector.shape_cast %62 : vector<1x1x64xf32> to vector<64xf32>
    %64 = vector.shape_cast %63 : vector<64xf32> to vector<1x1x64xf32>
    %65 = vector.broadcast %64 : vector<1x1x64xf32> to vector<7x7x64xf32>
    %66 = arith.mulf %61, %65 : vector<7x7x64xf32>
    %67 = arith.addf %58, %66 : vector<7x7x64xf32>
    %c1_i32_21 = arith.constant 1 : i32
    %68 = arith.addi %arg0, %c1_i32_21 : i32
    %69 = arith.index_cast %68 : i32 to index
    %c2_22 = arith.constant 2 : index
    %c0_23 = arith.constant 0 : index
    %70 = vector.load %arg1[%69, %c2_22, %c0_23] : memref<12x12x64xf32, #tpu.memory_space<vmem>>, vector<7x7x64xf32>
    %71 = vector.extract_strided_slice %3 {offsets = [1, 2, 0], sizes = [1, 1, 64], strides = [1, 1, 1]} : vector<5x5x64xf32> to vector<1x1x64xf32>
    %72 = vector.shape_cast %71 : vector<1x1x64xf32> to vector<64xf32>
    %73 = vector.shape_cast %72 : vector<64xf32> to vector<1x1x64xf32>
    %74 = vector.broadcast %73 : vector<1x1x64xf32> to vector<7x7x64xf32>
    %75 = arith.mulf %70, %74 : vector<7x7x64xf32>
    %76 = arith.addf %67, %75 : vector<7x7x64xf32>
    %c1_i32_24 = arith.constant 1 : i32
    %77 = arith.addi %arg0, %c1_i32_24 : i32
    %78 = arith.index_cast %77 : i32 to index
    %c3_25 = arith.constant 3 : index
    %c0_26 = arith.constant 0 : index
    %79 = vector.load %arg1[%78, %c3_25, %c0_26] : memref<12x12x64xf32, #tpu.memory_space<vmem>>, vector<7x7x64xf32>
    %80 = vector.extract_strided_slice %3 {offsets = [1, 3, 0], sizes = [1, 1, 64], strides = [1, 1, 1]} : vector<5x5x64xf32> to vector<1x1x64xf32>
    %81 = vector.shape_cast %80 : vector<1x1x64xf32> to vector<64xf32>
    %82 = vector.shape_cast %81 : vector<64xf32> to vector<1x1x64xf32>
    %83 = vector.broadcast %82 : vector<1x1x64xf32> to vector<7x7x64xf32>
    %84 = arith.mulf %79, %83 : vector<7x7x64xf32>
    %85 = arith.addf %76, %84 : vector<7x7x64xf32>
    %c1_i32_27 = arith.constant 1 : i32
    %86 = arith.addi %arg0, %c1_i32_27 : i32
    %87 = arith.index_cast %86 : i32 to index
    %c4_28 = arith.constant 4 : index
    %c0_29 = arith.constant 0 : index
    %88 = vector.load %arg1[%87, %c4_28, %c0_29] : memref<12x12x64xf32, #tpu.memory_space<vmem>>, vector<7x7x64xf32>
    %89 = vector.extract_strided_slice %3 {offsets = [1, 4, 0], sizes = [1, 1, 64], strides = [1, 1, 1]} : vector<5x5x64xf32> to vector<1x1x64xf32>
    %90 = vector.shape_cast %89 : vector<1x1x64xf32> to vector<64xf32>
    %91 = vector.shape_cast %90 : vector<64xf32> to vector<1x1x64xf32>
    %92 = vector.broadcast %91 : vector<1x1x64xf32> to vector<7x7x64xf32>
    %93 = arith.mulf %88, %92 : vector<7x7x64xf32>
    %94 = arith.addf %85, %93 : vector<7x7x64xf32>
    %c2_i32 = arith.constant 2 : i32
    %95 = arith.addi %arg0, %c2_i32 : i32
    %96 = arith.index_cast %95 : i32 to index
    %c0_30 = arith.constant 0 : index
    %c0_31 = arith.constant 0 : index
    %97 = vector.load %arg1[%96, %c0_30, %c0_31] : memref<12x12x64xf32, #tpu.memory_space<vmem>>, vector<7x7x64xf32>
    %98 = vector.extract_strided_slice %3 {offsets = [2, 0, 0], sizes = [1, 1, 64], strides = [1, 1, 1]} : vector<5x5x64xf32> to vector<1x1x64xf32>
    %99 = vector.shape_cast %98 : vector<1x1x64xf32> to vector<64xf32>
    %100 = vector.shape_cast %99 : vector<64xf32> to vector<1x1x64xf32>
    %101 = vector.broadcast %100 : vector<1x1x64xf32> to vector<7x7x64xf32>
    %102 = arith.mulf %97, %101 : vector<7x7x64xf32>
    %103 = arith.addf %94, %102 : vector<7x7x64xf32>
    %c2_i32_32 = arith.constant 2 : i32
    %104 = arith.addi %arg0, %c2_i32_32 : i32
    %105 = arith.index_cast %104 : i32 to index
    %c1_33 = arith.constant 1 : index
    %c0_34 = arith.constant 0 : index
    %106 = vector.load %arg1[%105, %c1_33, %c0_34] : memref<12x12x64xf32, #tpu.memory_space<vmem>>, vector<7x7x64xf32>
    %107 = vector.extract_strided_slice %3 {offsets = [2, 1, 0], sizes = [1, 1, 64], strides = [1, 1, 1]} : vector<5x5x64xf32> to vector<1x1x64xf32>
    %108 = vector.shape_cast %107 : vector<1x1x64xf32> to vector<64xf32>
    %109 = vector.shape_cast %108 : vector<64xf32> to vector<1x1x64xf32>
    %110 = vector.broadcast %109 : vector<1x1x64xf32> to vector<7x7x64xf32>
    %111 = arith.mulf %106, %110 : vector<7x7x64xf32>
    %112 = arith.addf %103, %111 : vector<7x7x64xf32>
    %c2_i32_35 = arith.constant 2 : i32
    %113 = arith.addi %arg0, %c2_i32_35 : i32
    %114 = arith.index_cast %113 : i32 to index
    %c2_36 = arith.constant 2 : index
    %c0_37 = arith.constant 0 : index
    %115 = vector.load %arg1[%114, %c2_36, %c0_37] : memref<12x12x64xf32, #tpu.memory_space<vmem>>, vector<7x7x64xf32>
    %116 = vector.extract_strided_slice %3 {offsets = [2, 2, 0], sizes = [1, 1, 64], strides = [1, 1, 1]} : vector<5x5x64xf32> to vector<1x1x64xf32>
    %117 = vector.shape_cast %116 : vector<1x1x64xf32> to vector<64xf32>
    %118 = vector.shape_cast %117 : vector<64xf32> to vector<1x1x64xf32>
    %119 = vector.broadcast %118 : vector<1x1x64xf32> to vector<7x7x64xf32>
    %120 = arith.mulf %115, %119 : vector<7x7x64xf32>
    %121 = arith.addf %112, %120 : vector<7x7x64xf32>
    %c2_i32_38 = arith.constant 2 : i32
    %122 = arith.addi %arg0, %c2_i32_38 : i32
    %123 = arith.index_cast %122 : i32 to index
    %c3_39 = arith.constant 3 : index
    %c0_40 = arith.constant 0 : index
    %124 = vector.load %arg1[%123, %c3_39, %c0_40] : memref<12x12x64xf32, #tpu.memory_space<vmem>>, vector<7x7x64xf32>
    %125 = vector.extract_strided_slice %3 {offsets = [2, 3, 0], sizes = [1, 1, 64], strides = [1, 1, 1]} : vector<5x5x64xf32> to vector<1x1x64xf32>
    %126 = vector.shape_cast %125 : vector<1x1x64xf32> to vector<64xf32>
    %127 = vector.shape_cast %126 : vector<64xf32> to vector<1x1x64xf32>
    %128 = vector.broadcast %127 : vector<1x1x64xf32> to vector<7x7x64xf32>
    %129 = arith.mulf %124, %128 : vector<7x7x64xf32>
    %130 = arith.addf %121, %129 : vector<7x7x64xf32>
    %c2_i32_41 = arith.constant 2 : i32
    %131 = arith.addi %arg0, %c2_i32_41 : i32
    %132 = arith.index_cast %131 : i32 to index
    %c4_42 = arith.constant 4 : index
    %c0_43 = arith.constant 0 : index
    %133 = vector.load %arg1[%132, %c4_42, %c0_43] : memref<12x12x64xf32, #tpu.memory_space<vmem>>, vector<7x7x64xf32>
    %134 = vector.extract_strided_slice %3 {offsets = [2, 4, 0], sizes = [1, 1, 64], strides = [1, 1, 1]} : vector<5x5x64xf32> to vector<1x1x64xf32>
    %135 = vector.shape_cast %134 : vector<1x1x64xf32> to vector<64xf32>
    %136 = vector.shape_cast %135 : vector<64xf32> to vector<1x1x64xf32>
    %137 = vector.broadcast %136 : vector<1x1x64xf32> to vector<7x7x64xf32>
    %138 = arith.mulf %133, %137 : vector<7x7x64xf32>
    %139 = arith.addf %130, %138 : vector<7x7x64xf32>
    %c3_i32 = arith.constant 3 : i32
    %140 = arith.addi %arg0, %c3_i32 : i32
    %141 = arith.index_cast %140 : i32 to index
    %c0_44 = arith.constant 0 : index
    %c0_45 = arith.constant 0 : index
    %142 = vector.load %arg1[%141, %c0_44, %c0_45] : memref<12x12x64xf32, #tpu.memory_space<vmem>>, vector<7x7x64xf32>
    %143 = vector.extract_strided_slice %3 {offsets = [3, 0, 0], sizes = [1, 1, 64], strides = [1, 1, 1]} : vector<5x5x64xf32> to vector<1x1x64xf32>
    %144 = vector.shape_cast %143 : vector<1x1x64xf32> to vector<64xf32>
    %145 = vector.shape_cast %144 : vector<64xf32> to vector<1x1x64xf32>
    %146 = vector.broadcast %145 : vector<1x1x64xf32> to vector<7x7x64xf32>
    %147 = arith.mulf %142, %146 : vector<7x7x64xf32>
    %148 = arith.addf %139, %147 : vector<7x7x64xf32>
    %c3_i32_46 = arith.constant 3 : i32
    %149 = arith.addi %arg0, %c3_i32_46 : i32
    %150 = arith.index_cast %149 : i32 to index
    %c1_47 = arith.constant 1 : index
    %c0_48 = arith.constant 0 : index
    %151 = vector.load %arg1[%150, %c1_47, %c0_48] : memref<12x12x64xf32, #tpu.memory_space<vmem>>, vector<7x7x64xf32>
    %152 = vector.extract_strided_slice %3 {offsets = [3, 1, 0], sizes = [1, 1, 64], strides = [1, 1, 1]} : vector<5x5x64xf32> to vector<1x1x64xf32>
    %153 = vector.shape_cast %152 : vector<1x1x64xf32> to vector<64xf32>
    %154 = vector.shape_cast %153 : vector<64xf32> to vector<1x1x64xf32>
    %155 = vector.broadcast %154 : vector<1x1x64xf32> to vector<7x7x64xf32>
    %156 = arith.mulf %151, %155 : vector<7x7x64xf32>
    %157 = arith.addf %148, %156 : vector<7x7x64xf32>
    %c3_i32_49 = arith.constant 3 : i32
    %158 = arith.addi %arg0, %c3_i32_49 : i32
    %159 = arith.index_cast %158 : i32 to index
    %c2_50 = arith.constant 2 : index
    %c0_51 = arith.constant 0 : index
    %160 = vector.load %arg1[%159, %c2_50, %c0_51] : memref<12x12x64xf32, #tpu.memory_space<vmem>>, vector<7x7x64xf32>
    %161 = vector.extract_strided_slice %3 {offsets = [3, 2, 0], sizes = [1, 1, 64], strides = [1, 1, 1]} : vector<5x5x64xf32> to vector<1x1x64xf32>
    %162 = vector.shape_cast %161 : vector<1x1x64xf32> to vector<64xf32>
    %163 = vector.shape_cast %162 : vector<64xf32> to vector<1x1x64xf32>
    %164 = vector.broadcast %163 : vector<1x1x64xf32> to vector<7x7x64xf32>
    %165 = arith.mulf %160, %164 : vector<7x7x64xf32>
    %166 = arith.addf %157, %165 : vector<7x7x64xf32>
    %c3_i32_52 = arith.constant 3 : i32
    %167 = arith.addi %arg0, %c3_i32_52 : i32
    %168 = arith.index_cast %167 : i32 to index
    %c3_53 = arith.constant 3 : index
    %c0_54 = arith.constant 0 : index
    %169 = vector.load %arg1[%168, %c3_53, %c0_54] : memref<12x12x64xf32, #tpu.memory_space<vmem>>, vector<7x7x64xf32>
    %170 = vector.extract_strided_slice %3 {offsets = [3, 3, 0], sizes = [1, 1, 64], strides = [1, 1, 1]} : vector<5x5x64xf32> to vector<1x1x64xf32>
    %171 = vector.shape_cast %170 : vector<1x1x64xf32> to vector<64xf32>
    %172 = vector.shape_cast %171 : vector<64xf32> to vector<1x1x64xf32>
    %173 = vector.broadcast %172 : vector<1x1x64xf32> to vector<7x7x64xf32>
    %174 = arith.mulf %169, %173 : vector<7x7x64xf32>
    %175 = arith.addf %166, %174 : vector<7x7x64xf32>
    %c3_i32_55 = arith.constant 3 : i32
    %176 = arith.addi %arg0, %c3_i32_55 : i32
    %177 = arith.index_cast %176 : i32 to index
    %c4_56 = arith.constant 4 : index
    %c0_57 = arith.constant 0 : index
    %178 = vector.load %arg1[%177, %c4_56, %c0_57] : memref<12x12x64xf32, #tpu.memory_space<vmem>>, vector<7x7x64xf32>
    %179 = vector.extract_strided_slice %3 {offsets = [3, 4, 0], sizes = [1, 1, 64], strides = [1, 1, 1]} : vector<5x5x64xf32> to vector<1x1x64xf32>
    %180 = vector.shape_cast %179 : vector<1x1x64xf32> to vector<64xf32>
    %181 = vector.shape_cast %180 : vector<64xf32> to vector<1x1x64xf32>
    %182 = vector.broadcast %181 : vector<1x1x64xf32> to vector<7x7x64xf32>
    %183 = arith.mulf %178, %182 : vector<7x7x64xf32>
    %184 = arith.addf %175, %183 : vector<7x7x64xf32>
    %c4_i32 = arith.constant 4 : i32
    %185 = arith.addi %arg0, %c4_i32 : i32
    %186 = arith.index_cast %185 : i32 to index
    %c0_58 = arith.constant 0 : index
    %c0_59 = arith.constant 0 : index
    %187 = vector.load %arg1[%186, %c0_58, %c0_59] : memref<12x12x64xf32, #tpu.memory_space<vmem>>, vector<7x7x64xf32>
    %188 = vector.extract_strided_slice %3 {offsets = [4, 0, 0], sizes = [1, 1, 64], strides = [1, 1, 1]} : vector<5x5x64xf32> to vector<1x1x64xf32>
    %189 = vector.shape_cast %188 : vector<1x1x64xf32> to vector<64xf32>
    %190 = vector.shape_cast %189 : vector<64xf32> to vector<1x1x64xf32>
    %191 = vector.broadcast %190 : vector<1x1x64xf32> to vector<7x7x64xf32>
    %192 = arith.mulf %187, %191 : vector<7x7x64xf32>
    %193 = arith.addf %184, %192 : vector<7x7x64xf32>
    %c4_i32_60 = arith.constant 4 : i32
    %194 = arith.addi %arg0, %c4_i32_60 : i32
    %195 = arith.index_cast %194 : i32 to index
    %c1_61 = arith.constant 1 : index
    %c0_62 = arith.constant 0 : index
    %196 = vector.load %arg1[%195, %c1_61, %c0_62] : memref<12x12x64xf32, #tpu.memory_space<vmem>>, vector<7x7x64xf32>
    %197 = vector.extract_strided_slice %3 {offsets = [4, 1, 0], sizes = [1, 1, 64], strides = [1, 1, 1]} : vector<5x5x64xf32> to vector<1x1x64xf32>
    %198 = vector.shape_cast %197 : vector<1x1x64xf32> to vector<64xf32>
    %199 = vector.shape_cast %198 : vector<64xf32> to vector<1x1x64xf32>
    %200 = vector.broadcast %199 : vector<1x1x64xf32> to vector<7x7x64xf32>
    %201 = arith.mulf %196, %200 : vector<7x7x64xf32>
    %202 = arith.addf %193, %201 : vector<7x7x64xf32>
    %c4_i32_63 = arith.constant 4 : i32
    %203 = arith.addi %arg0, %c4_i32_63 : i32
    %204 = arith.index_cast %203 : i32 to index
    %c2_64 = arith.constant 2 : index
    %c0_65 = arith.constant 0 : index
    %205 = vector.load %arg1[%204, %c2_64, %c0_65] : memref<12x12x64xf32, #tpu.memory_space<vmem>>, vector<7x7x64xf32>
    %206 = vector.extract_strided_slice %3 {offsets = [4, 2, 0], sizes = [1, 1, 64], strides = [1, 1, 1]} : vector<5x5x64xf32> to vector<1x1x64xf32>
    %207 = vector.shape_cast %206 : vector<1x1x64xf32> to vector<64xf32>
    %208 = vector.shape_cast %207 : vector<64xf32> to vector<1x1x64xf32>
    %209 = vector.broadcast %208 : vector<1x1x64xf32> to vector<7x7x64xf32>
    %210 = arith.mulf %205, %209 : vector<7x7x64xf32>
    %211 = arith.addf %202, %210 : vector<7x7x64xf32>
    %c4_i32_66 = arith.constant 4 : i32
    %212 = arith.addi %arg0, %c4_i32_66 : i32
    %213 = arith.index_cast %212 : i32 to index
    %c3_67 = arith.constant 3 : index
    %c0_68 = arith.constant 0 : index
    %214 = vector.load %arg1[%213, %c3_67, %c0_68] : memref<12x12x64xf32, #tpu.memory_space<vmem>>, vector<7x7x64xf32>
    %215 = vector.extract_strided_slice %3 {offsets = [4, 3, 0], sizes = [1, 1, 64], strides = [1, 1, 1]} : vector<5x5x64xf32> to vector<1x1x64xf32>
    %216 = vector.shape_cast %215 : vector<1x1x64xf32> to vector<64xf32>
    %217 = vector.shape_cast %216 : vector<64xf32> to vector<1x1x64xf32>
    %218 = vector.broadcast %217 : vector<1x1x64xf32> to vector<7x7x64xf32>
    %219 = arith.mulf %214, %218 : vector<7x7x64xf32>
    %220 = arith.addf %211, %219 : vector<7x7x64xf32>
    %c4_i32_69 = arith.constant 4 : i32
    %221 = arith.addi %arg0, %c4_i32_69 : i32
    %222 = arith.index_cast %221 : i32 to index
    %c4_70 = arith.constant 4 : index
    %c0_71 = arith.constant 0 : index
    %223 = vector.load %arg1[%222, %c4_70, %c0_71] : memref<12x12x64xf32, #tpu.memory_space<vmem>>, vector<7x7x64xf32>
    %224 = vector.extract_strided_slice %3 {offsets = [4, 4, 0], sizes = [1, 1, 64], strides = [1, 1, 1]} : vector<5x5x64xf32> to vector<1x1x64xf32>
    %225 = vector.shape_cast %224 : vector<1x1x64xf32> to vector<64xf32>
    %226 = vector.shape_cast %225 : vector<64xf32> to vector<1x1x64xf32>
    %227 = vector.broadcast %226 : vector<1x1x64xf32> to vector<7x7x64xf32>
    %228 = arith.mulf %223, %227 : vector<7x7x64xf32>
    %229 = arith.addf %220, %228 : vector<7x7x64xf32>
    %230 = vector.shape_cast %1 : vector<64xf32> to vector<1x1x64xf32>
    %231 = vector.broadcast %230 : vector<1x1x64xf32> to vector<7x7x64xf32>
    %232 = arith.addf %229, %231 : vector<7x7x64xf32>
    %cst_72 = arith.constant 3.000000e+00 : f32
    %233 = vector.broadcast %cst_72 : f32 to vector<7x7x64xf32>
    %234 = arith.addf %232, %233 : vector<7x7x64xf32>
    %cst_73 = arith.constant 0.000000e+00 : f32
    %cst_74 = arith.constant 6.000000e+00 : f32
    %235 = vector.broadcast %cst_73 : f32 to vector<7x7x64xf32>
    %236 = arith.maximumf %235, %234 : vector<7x7x64xf32>
    %237 = vector.broadcast %cst_74 : f32 to vector<7x7x64xf32>
    %238 = arith.minimumf %237, %236 : vector<7x7x64xf32>
    %cst_75 = arith.constant 0.166666672 : f32
    %239 = vector.broadcast %cst_75 : f32 to vector<7x7x64xf32>
    %240 = arith.mulf %238, %239 : vector<7x7x64xf32>
    %c0_76 = arith.constant 0 : index
    %c0_77 = arith.constant 0 : index
    %c0_78 = arith.constant 0 : index
    %c0_79 = arith.constant 0 : index
    %c0_80 = arith.constant 0 : index
    %241 = vector.load %arg4[%c0_76, %c0_77, %c0_78, %c0_79, %c0_80] : memref<1x2x7x7x64xf32, #tpu.memory_space<vmem>>, vector<1x1x7x7x64xf32>
    %242 = vector.shape_cast %241 : vector<1x1x7x7x64xf32> to vector<7x7x64xf32>
    %243 = vector.shape_cast %240 : vector<7x7x64xf32> to vector<1x1x7x7x64xf32>
    tpu.vector_store %arg4[%c0_76, %c0_77, %c0_78, %c0_79, %c0_80], %243 {strides = array<i32>} : memref<1x2x7x7x64xf32, #tpu.memory_space<vmem>>, vector<1x1x7x7x64xf32>,
    %c0_81 = arith.constant 0 : index
    %c1_82 = arith.constant 1 : index
    %c0_83 = arith.constant 0 : index
    %c0_84 = arith.constant 0 : index
    %c0_85 = arith.constant 0 : index
    %244 = vector.load %arg2[%c0_81, %c1_82, %c0_83, %c0_84, %c0_85] : memref<1x2x5x5x64xf32, #tpu.memory_space<vmem>>, vector<1x1x5x5x64xf32>
    %245 = vector.shape_cast %244 : vector<1x1x5x5x64xf32> to vector<5x5x64xf32>
    %cst_86 = arith.constant 0.000000e+00 : f32
    %246 = vector.broadcast %cst_86 : f32 to vector<7x7x64xf32>
    %c0_i32_87 = arith.constant 0 : i32
    %247 = arith.addi %arg0, %c0_i32_87 : i32
    %248 = arith.index_cast %247 : i32 to index
    %c1_88 = arith.constant 1 : index
    %c0_89 = arith.constant 0 : index
    %249 = vector.load %arg1[%248, %c1_88, %c0_89] : memref<12x12x64xf32, #tpu.memory_space<vmem>>, vector<7x7x64xf32>
    %250 = vector.extract_strided_slice %245 {offsets = [0, 0, 0], sizes = [1, 1, 64], strides = [1, 1, 1]} : vector<5x5x64xf32> to vector<1x1x64xf32>
    %251 = vector.shape_cast %250 : vector<1x1x64xf32> to vector<64xf32>
    %252 = vector.shape_cast %251 : vector<64xf32> to vector<1x1x64xf32>
    %253 = vector.broadcast %252 : vector<1x1x64xf32> to vector<7x7x64xf32>
    %254 = arith.mulf %249, %253 : vector<7x7x64xf32>
    %255 = arith.addf %246, %254 : vector<7x7x64xf32>
    %c0_i32_90 = arith.constant 0 : i32
    %256 = arith.addi %arg0, %c0_i32_90 : i32
    %257 = arith.index_cast %256 : i32 to index
    %c2_91 = arith.constant 2 : index
    %c0_92 = arith.constant 0 : index
    %258 = vector.load %arg1[%257, %c2_91, %c0_92] : memref<12x12x64xf32, #tpu.memory_space<vmem>>, vector<7x7x64xf32>
    %259 = vector.extract_strided_slice %245 {offsets = [0, 1, 0], sizes = [1, 1, 64], strides = [1, 1, 1]} : vector<5x5x64xf32> to vector<1x1x64xf32>
    %260 = vector.shape_cast %259 : vector<1x1x64xf32> to vector<64xf32>
    %261 = vector.shape_cast %260 : vector<64xf32> to vector<1x1x64xf32>
    %262 = vector.broadcast %261 : vector<1x1x64xf32> to vector<7x7x64xf32>
    %263 = arith.mulf %258, %262 : vector<7x7x64xf32>
    %264 = arith.addf %255, %263 : vector<7x7x64xf32>
    %c0_i32_93 = arith.constant 0 : i32
    %265 = arith.addi %arg0, %c0_i32_93 : i32
    %266 = arith.index_cast %265 : i32 to index
    %c3_94 = arith.constant 3 : index
    %c0_95 = arith.constant 0 : index
    %267 = vector.load %arg1[%266, %c3_94, %c0_95] : memref<12x12x64xf32, #tpu.memory_space<vmem>>, vector<7x7x64xf32>
    %268 = vector.extract_strided_slice %245 {offsets = [0, 2, 0], sizes = [1, 1, 64], strides = [1, 1, 1]} : vector<5x5x64xf32> to vector<1x1x64xf32>
    %269 = vector.shape_cast %268 : vector<1x1x64xf32> to vector<64xf32>
    %270 = vector.shape_cast %269 : vector<64xf32> to vector<1x1x64xf32>
    %271 = vector.broadcast %270 : vector<1x1x64xf32> to vector<7x7x64xf32>
    %272 = arith.mulf %267, %271 : vector<7x7x64xf32>
    %273 = arith.addf %264, %272 : vector<7x7x64xf32>
    %c0_i32_96 = arith.constant 0 : i32
    %274 = arith.addi %arg0, %c0_i32_96 : i32
    %275 = arith.index_cast %274 : i32 to index
    %c4_97 = arith.constant 4 : index
    %c0_98 = arith.constant 0 : index
    %276 = vector.load %arg1[%275, %c4_97, %c0_98] : memref<12x12x64xf32, #tpu.memory_space<vmem>>, vector<7x7x64xf32>
    %277 = vector.extract_strided_slice %245 {offsets = [0, 3, 0], sizes = [1, 1, 64], strides = [1, 1, 1]} : vector<5x5x64xf32> to vector<1x1x64xf32>
    %278 = vector.shape_cast %277 : vector<1x1x64xf32> to vector<64xf32>
    %279 = vector.shape_cast %278 : vector<64xf32> to vector<1x1x64xf32>
    %280 = vector.broadcast %279 : vector<1x1x64xf32> to vector<7x7x64xf32>
    %281 = arith.mulf %276, %280 : vector<7x7x64xf32>
    %282 = arith.addf %273, %281 : vector<7x7x64xf32>
    %c0_i32_99 = arith.constant 0 : i32
    %283 = arith.addi %arg0, %c0_i32_99 : i32
    %284 = arith.index_cast %283 : i32 to index
    %c5 = arith.constant 5 : index
    %c0_100 = arith.constant 0 : index
    %285 = vector.load %arg1[%284, %c5, %c0_100] : memref<12x12x64xf32, #tpu.memory_space<vmem>>, vector<7x7x64xf32>
    %286 = vector.extract_strided_slice %245 {offsets = [0, 4, 0], sizes = [1, 1, 64], strides = [1, 1, 1]} : vector<5x5x64xf32> to vector<1x1x64xf32>
    %287 = vector.shape_cast %286 : vector<1x1x64xf32> to vector<64xf32>
    %288 = vector.shape_cast %287 : vector<64xf32> to vector<1x1x64xf32>
    %289 = vector.broadcast %288 : vector<1x1x64xf32> to vector<7x7x64xf32>
    %290 = arith.mulf %285, %289 : vector<7x7x64xf32>
    %291 = arith.addf %282, %290 : vector<7x7x64xf32>
    %c1_i32_101 = arith.constant 1 : i32
    %292 = arith.addi %arg0, %c1_i32_101 : i32
    %293 = arith.index_cast %292 : i32 to index
    %c1_102 = arith.constant 1 : index
    %c0_103 = arith.constant 0 : index
    %294 = vector.load %arg1[%293, %c1_102, %c0_103] : memref<12x12x64xf32, #tpu.memory_space<vmem>>, vector<7x7x64xf32>
    %295 = vector.extract_strided_slice %245 {offsets = [1, 0, 0], sizes = [1, 1, 64], strides = [1, 1, 1]} : vector<5x5x64xf32> to vector<1x1x64xf32>
    %296 = vector.shape_cast %295 : vector<1x1x64xf32> to vector<64xf32>
    %297 = vector.shape_cast %296 : vector<64xf32> to vector<1x1x64xf32>
    %298 = vector.broadcast %297 : vector<1x1x64xf32> to vector<7x7x64xf32>
    %299 = arith.mulf %294, %298 : vector<7x7x64xf32>
    %300 = arith.addf %291, %299 : vector<7x7x64xf32>
    %c1_i32_104 = arith.constant 1 : i32
    %301 = arith.addi %arg0, %c1_i32_104 : i32
    %302 = arith.index_cast %301 : i32 to index
    %c2_105 = arith.constant 2 : index
    %c0_106 = arith.constant 0 : index
    %303 = vector.load %arg1[%302, %c2_105, %c0_106] : memref<12x12x64xf32, #tpu.memory_space<vmem>>, vector<7x7x64xf32>
    %304 = vector.extract_strided_slice %245 {offsets = [1, 1, 0], sizes = [1, 1, 64], strides = [1, 1, 1]} : vector<5x5x64xf32> to vector<1x1x64xf32>
    %305 = vector.shape_cast %304 : vector<1x1x64xf32> to vector<64xf32>
    %306 = vector.shape_cast %305 : vector<64xf32> to vector<1x1x64xf32>
    %307 = vector.broadcast %306 : vector<1x1x64xf32> to vector<7x7x64xf32>
    %308 = arith.mulf %303, %307 : vector<7x7x64xf32>
    %309 = arith.addf %300, %308 : vector<7x7x64xf32>
    %c1_i32_107 = arith.constant 1 : i32
    %310 = arith.addi %arg0, %c1_i32_107 : i32
    %311 = arith.index_cast %310 : i32 to index
    %c3_108 = arith.constant 3 : index
    %c0_109 = arith.constant 0 : index
    %312 = vector.load %arg1[%311, %c3_108, %c0_109] : memref<12x12x64xf32, #tpu.memory_space<vmem>>, vector<7x7x64xf32>
    %313 = vector.extract_strided_slice %245 {offsets = [1, 2, 0], sizes = [1, 1, 64], strides = [1, 1, 1]} : vector<5x5x64xf32> to vector<1x1x64xf32>
    %314 = vector.shape_cast %313 : vector<1x1x64xf32> to vector<64xf32>
    %315 = vector.shape_cast %314 : vector<64xf32> to vector<1x1x64xf32>
    %316 = vector.broadcast %315 : vector<1x1x64xf32> to vector<7x7x64xf32>
    %317 = arith.mulf %312, %316 : vector<7x7x64xf32>
    %318 = arith.addf %309, %317 : vector<7x7x64xf32>
    %c1_i32_110 = arith.constant 1 : i32
    %319 = arith.addi %arg0, %c1_i32_110 : i32
    %320 = arith.index_cast %319 : i32 to index
    %c4_111 = arith.constant 4 : index
    %c0_112 = arith.constant 0 : index
    %321 = vector.load %arg1[%320, %c4_111, %c0_112] : memref<12x12x64xf32, #tpu.memory_space<vmem>>, vector<7x7x64xf32>
    %322 = vector.extract_strided_slice %245 {offsets = [1, 3, 0], sizes = [1, 1, 64], strides = [1, 1, 1]} : vector<5x5x64xf32> to vector<1x1x64xf32>
    %323 = vector.shape_cast %322 : vector<1x1x64xf32> to vector<64xf32>
    %324 = vector.shape_cast %323 : vector<64xf32> to vector<1x1x64xf32>
    %325 = vector.broadcast %324 : vector<1x1x64xf32> to vector<7x7x64xf32>
    %326 = arith.mulf %321, %325 : vector<7x7x64xf32>
    %327 = arith.addf %318, %326 : vector<7x7x64xf32>
    %c1_i32_113 = arith.constant 1 : i32
    %328 = arith.addi %arg0, %c1_i32_113 : i32
    %329 = arith.index_cast %328 : i32 to index
    %c5_114 = arith.constant 5 : index
    %c0_115 = arith.constant 0 : index
    %330 = vector.load %arg1[%329, %c5_114, %c0_115] : memref<12x12x64xf32, #tpu.memory_space<vmem>>, vector<7x7x64xf32>
    %331 = vector.extract_strided_slice %245 {offsets = [1, 4, 0], sizes = [1, 1, 64], strides = [1, 1, 1]} : vector<5x5x64xf32> to vector<1x1x64xf32>
    %332 = vector.shape_cast %331 : vector<1x1x64xf32> to vector<64xf32>
    %333 = vector.shape_cast %332 : vector<64xf32> to vector<1x1x64xf32>
    %334 = vector.broadcast %333 : vector<1x1x64xf32> to vector<7x7x64xf32>
    %335 = arith.mulf %330, %334 : vector<7x7x64xf32>
    %336 = arith.addf %327, %335 : vector<7x7x64xf32>
    %c2_i32_116 = arith.constant 2 : i32
    %337 = arith.addi %arg0, %c2_i32_116 : i32
    %338 = arith.index_cast %337 : i32 to index
    %c1_117 = arith.constant 1 : index
    %c0_118 = arith.constant 0 : index
    %339 = vector.load %arg1[%338, %c1_117, %c0_118] : memref<12x12x64xf32, #tpu.memory_space<vmem>>, vector<7x7x64xf32>
    %340 = vector.extract_strided_slice %245 {offsets = [2, 0, 0], sizes = [1, 1, 64], strides = [1, 1, 1]} : vector<5x5x64xf32> to vector<1x1x64xf32>
    %341 = vector.shape_cast %340 : vector<1x1x64xf32> to vector<64xf32>
    %342 = vector.shape_cast %341 : vector<64xf32> to vector<1x1x64xf32>
    %343 = vector.broadcast %342 : vector<1x1x64xf32> to vector<7x7x64xf32>
    %344 = arith.mulf %339, %343 : vector<7x7x64xf32>
    %345 = arith.addf %336, %344 : vector<7x7x64xf32>
    %c2_i32_119 = arith.constant 2 : i32
    %346 = arith.addi %arg0, %c2_i32_119 : i32
    %347 = arith.index_cast %346 : i32 to index
    %c2_120 = arith.constant 2 : index
    %c0_121 = arith.constant 0 : index
    %348 = vector.load %arg1[%347, %c2_120, %c0_121] : memref<12x12x64xf32, #tpu.memory_space<vmem>>, vector<7x7x64xf32>
    %349 = vector.extract_strided_slice %245 {offsets = [2, 1, 0], sizes = [1, 1, 64], strides = [1, 1, 1]} : vector<5x5x64xf32> to vector<1x1x64xf32>
    %350 = vector.shape_cast %349 : vector<1x1x64xf32> to vector<64xf32>
    %351 = vector.shape_cast %350 : vector<64xf32> to vector<1x1x64xf32>
    %352 = vector.broadcast %351 : vector<1x1x64xf32> to vector<7x7x64xf32>
    %353 = arith.mulf %348, %352 : vector<7x7x64xf32>
    %354 = arith.addf %345, %353 : vector<7x7x64xf32>
    %c2_i32_122 = arith.constant 2 : i32
    %355 = arith.addi %arg0, %c2_i32_122 : i32
    %356 = arith.index_cast %355 : i32 to index
    %c3_123 = arith.constant 3 : index
    %c0_124 = arith.constant 0 : index
    %357 = vector.load %arg1[%356, %c3_123, %c0_124] : memref<12x12x64xf32, #tpu.memory_space<vmem>>, vector<7x7x64xf32>
    %358 = vector.extract_strided_slice %245 {offsets = [2, 2, 0], sizes = [1, 1, 64], strides = [1, 1, 1]} : vector<5x5x64xf32> to vector<1x1x64xf32>
    %359 = vector.shape_cast %358 : vector<1x1x64xf32> to vector<64xf32>
    %360 = vector.shape_cast %359 : vector<64xf32> to vector<1x1x64xf32>
    %361 = vector.broadcast %360 : vector<1x1x64xf32> to vector<7x7x64xf32>
    %362 = arith.mulf %357, %361 : vector<7x7x64xf32>
    %363 = arith.addf %354, %362 : vector<7x7x64xf32>
    %c2_i32_125 = arith.constant 2 : i32
    %364 = arith.addi %arg0, %c2_i32_125 : i32
    %365 = arith.index_cast %364 : i32 to index
    %c4_126 = arith.constant 4 : index
    %c0_127 = arith.constant 0 : index
    %366 = vector.load %arg1[%365, %c4_126, %c0_127] : memref<12x12x64xf32, #tpu.memory_space<vmem>>, vector<7x7x64xf32>
    %367 = vector.extract_strided_slice %245 {offsets = [2, 3, 0], sizes = [1, 1, 64], strides = [1, 1, 1]} : vector<5x5x64xf32> to vector<1x1x64xf32>
    %368 = vector.shape_cast %367 : vector<1x1x64xf32> to vector<64xf32>
    %369 = vector.shape_cast %368 : vector<64xf32> to vector<1x1x64xf32>
    %370 = vector.broadcast %369 : vector<1x1x64xf32> to vector<7x7x64xf32>
    %371 = arith.mulf %366, %370 : vector<7x7x64xf32>
    %372 = arith.addf %363, %371 : vector<7x7x64xf32>
    %c2_i32_128 = arith.constant 2 : i32
    %373 = arith.addi %arg0, %c2_i32_128 : i32
    %374 = arith.index_cast %373 : i32 to index
    %c5_129 = arith.constant 5 : index
    %c0_130 = arith.constant 0 : index
    %375 = vector.load %arg1[%374, %c5_129, %c0_130] : memref<12x12x64xf32, #tpu.memory_space<vmem>>, vector<7x7x64xf32>
    %376 = vector.extract_strided_slice %245 {offsets = [2, 4, 0], sizes = [1, 1, 64], strides = [1, 1, 1]} : vector<5x5x64xf32> to vector<1x1x64xf32>
    %377 = vector.shape_cast %376 : vector<1x1x64xf32> to vector<64xf32>
    %378 = vector.shape_cast %377 : vector<64xf32> to vector<1x1x64xf32>
    %379 = vector.broadcast %378 : vector<1x1x64xf32> to vector<7x7x64xf32>
    %380 = arith.mulf %375, %379 : vector<7x7x64xf32>
    %381 = arith.addf %372, %380 : vector<7x7x64xf32>
    %c3_i32_131 = arith.constant 3 : i32
    %382 = arith.addi %arg0, %c3_i32_131 : i32
    %383 = arith.index_cast %382 : i32 to index
    %c1_132 = arith.constant 1 : index
    %c0_133 = arith.constant 0 : index
    %384 = vector.load %arg1[%383, %c1_132, %c0_133] : memref<12x12x64xf32, #tpu.memory_space<vmem>>, vector<7x7x64xf32>
    %385 = vector.extract_strided_slice %245 {offsets = [3, 0, 0], sizes = [1, 1, 64], strides = [1, 1, 1]} : vector<5x5x64xf32> to vector<1x1x64xf32>
    %386 = vector.shape_cast %385 : vector<1x1x64xf32> to vector<64xf32>
    %387 = vector.shape_cast %386 : vector<64xf32> to vector<1x1x64xf32>
    %388 = vector.broadcast %387 : vector<1x1x64xf32> to vector<7x7x64xf32>
    %389 = arith.mulf %384, %388 : vector<7x7x64xf32>
    %390 = arith.addf %381, %389 : vector<7x7x64xf32>
    %c3_i32_134 = arith.constant 3 : i32
    %391 = arith.addi %arg0, %c3_i32_134 : i32
    %392 = arith.index_cast %391 : i32 to index
    %c2_135 = arith.constant 2 : index
    %c0_136 = arith.constant 0 : index
    %393 = vector.load %arg1[%392, %c2_135, %c0_136] : memref<12x12x64xf32, #tpu.memory_space<vmem>>, vector<7x7x64xf32>
    %394 = vector.extract_strided_slice %245 {offsets = [3, 1, 0], sizes = [1, 1, 64], strides = [1, 1, 1]} : vector<5x5x64xf32> to vector<1x1x64xf32>
    %395 = vector.shape_cast %394 : vector<1x1x64xf32> to vector<64xf32>
    %396 = vector.shape_cast %395 : vector<64xf32> to vector<1x1x64xf32>
    %397 = vector.broadcast %396 : vector<1x1x64xf32> to vector<7x7x64xf32>
    %398 = arith.mulf %393, %397 : vector<7x7x64xf32>
    %399 = arith.addf %390, %398 : vector<7x7x64xf32>
    %c3_i32_137 = arith.constant 3 : i32
    %400 = arith.addi %arg0, %c3_i32_137 : i32
    %401 = arith.index_cast %400 : i32 to index
    %c3_138 = arith.constant 3 : index
    %c0_139 = arith.constant 0 : index
    %402 = vector.load %arg1[%401, %c3_138, %c0_139] : memref<12x12x64xf32, #tpu.memory_space<vmem>>, vector<7x7x64xf32>
    %403 = vector.extract_strided_slice %245 {offsets = [3, 2, 0], sizes = [1, 1, 64], strides = [1, 1, 1]} : vector<5x5x64xf32> to vector<1x1x64xf32>
    %404 = vector.shape_cast %403 : vector<1x1x64xf32> to vector<64xf32>
    %405 = vector.shape_cast %404 : vector<64xf32> to vector<1x1x64xf32>
    %406 = vector.broadcast %405 : vector<1x1x64xf32> to vector<7x7x64xf32>
    %407 = arith.mulf %402, %406 : vector<7x7x64xf32>
    %408 = arith.addf %399, %407 : vector<7x7x64xf32>
    %c3_i32_140 = arith.constant 3 : i32
    %409 = arith.addi %arg0, %c3_i32_140 : i32
    %410 = arith.index_cast %409 : i32 to index
    %c4_141 = arith.constant 4 : index
    %c0_142 = arith.constant 0 : index
    %411 = vector.load %arg1[%410, %c4_141, %c0_142] : memref<12x12x64xf32, #tpu.memory_space<vmem>>, vector<7x7x64xf32>
    %412 = vector.extract_strided_slice %245 {offsets = [3, 3, 0], sizes = [1, 1, 64], strides = [1, 1, 1]} : vector<5x5x64xf32> to vector<1x1x64xf32>
    %413 = vector.shape_cast %412 : vector<1x1x64xf32> to vector<64xf32>
    %414 = vector.shape_cast %413 : vector<64xf32> to vector<1x1x64xf32>
    %415 = vector.broadcast %414 : vector<1x1x64xf32> to vector<7x7x64xf32>
    %416 = arith.mulf %411, %415 : vector<7x7x64xf32>
    %417 = arith.addf %408, %416 : vector<7x7x64xf32>
    %c3_i32_143 = arith.constant 3 : i32
    %418 = arith.addi %arg0, %c3_i32_143 : i32
    %419 = arith.index_cast %418 : i32 to index
    %c5_144 = arith.constant 5 : index
    %c0_145 = arith.constant 0 : index
    %420 = vector.load %arg1[%419, %c5_144, %c0_145] : memref<12x12x64xf32, #tpu.memory_space<vmem>>, vector<7x7x64xf32>
    %421 = vector.extract_strided_slice %245 {offsets = [3, 4, 0], sizes = [1, 1, 64], strides = [1, 1, 1]} : vector<5x5x64xf32> to vector<1x1x64xf32>
    %422 = vector.shape_cast %421 : vector<1x1x64xf32> to vector<64xf32>
    %423 = vector.shape_cast %422 : vector<64xf32> to vector<1x1x64xf32>
    %424 = vector.broadcast %423 : vector<1x1x64xf32> to vector<7x7x64xf32>
    %425 = arith.mulf %420, %424 : vector<7x7x64xf32>
    %426 = arith.addf %417, %425 : vector<7x7x64xf32>
    %c4_i32_146 = arith.constant 4 : i32
    %427 = arith.addi %arg0, %c4_i32_146 : i32
    %428 = arith.index_cast %427 : i32 to index
    %c1_147 = arith.constant 1 : index
    %c0_148 = arith.constant 0 : index
    %429 = vector.load %arg1[%428, %c1_147, %c0_148] : memref<12x12x64xf32, #tpu.memory_space<vmem>>, vector<7x7x64xf32>
    %430 = vector.extract_strided_slice %245 {offsets = [4, 0, 0], sizes = [1, 1, 64], strides = [1, 1, 1]} : vector<5x5x64xf32> to vector<1x1x64xf32>
    %431 = vector.shape_cast %430 : vector<1x1x64xf32> to vector<64xf32>
    %432 = vector.shape_cast %431 : vector<64xf32> to vector<1x1x64xf32>
    %433 = vector.broadcast %432 : vector<1x1x64xf32> to vector<7x7x64xf32>
    %434 = arith.mulf %429, %433 : vector<7x7x64xf32>
    %435 = arith.addf %426, %434 : vector<7x7x64xf32>
    %c4_i32_149 = arith.constant 4 : i32
    %436 = arith.addi %arg0, %c4_i32_149 : i32
    %437 = arith.index_cast %436 : i32 to index
    %c2_150 = arith.constant 2 : index
    %c0_151 = arith.constant 0 : index
    %438 = vector.load %arg1[%437, %c2_150, %c0_151] : memref<12x12x64xf32, #tpu.memory_space<vmem>>, vector<7x7x64xf32>
    %439 = vector.extract_strided_slice %245 {offsets = [4, 1, 0], sizes = [1, 1, 64], strides = [1, 1, 1]} : vector<5x5x64xf32> to vector<1x1x64xf32>
    %440 = vector.shape_cast %439 : vector<1x1x64xf32> to vector<64xf32>
    %441 = vector.shape_cast %440 : vector<64xf32> to vector<1x1x64xf32>
    %442 = vector.broadcast %441 : vector<1x1x64xf32> to vector<7x7x64xf32>
    %443 = arith.mulf %438, %442 : vector<7x7x64xf32>
    %444 = arith.addf %435, %443 : vector<7x7x64xf32>
    %c4_i32_152 = arith.constant 4 : i32
    %445 = arith.addi %arg0, %c4_i32_152 : i32
    %446 = arith.index_cast %445 : i32 to index
    %c3_153 = arith.constant 3 : index
    %c0_154 = arith.constant 0 : index
    %447 = vector.load %arg1[%446, %c3_153, %c0_154] : memref<12x12x64xf32, #tpu.memory_space<vmem>>, vector<7x7x64xf32>
    %448 = vector.extract_strided_slice %245 {offsets = [4, 2, 0], sizes = [1, 1, 64], strides = [1, 1, 1]} : vector<5x5x64xf32> to vector<1x1x64xf32>
    %449 = vector.shape_cast %448 : vector<1x1x64xf32> to vector<64xf32>
    %450 = vector.shape_cast %449 : vector<64xf32> to vector<1x1x64xf32>
    %451 = vector.broadcast %450 : vector<1x1x64xf32> to vector<7x7x64xf32>
    %452 = arith.mulf %447, %451 : vector<7x7x64xf32>
    %453 = arith.addf %444, %452 : vector<7x7x64xf32>
    %c4_i32_155 = arith.constant 4 : i32
    %454 = arith.addi %arg0, %c4_i32_155 : i32
    %455 = arith.index_cast %454 : i32 to index
    %c4_156 = arith.constant 4 : index
    %c0_157 = arith.constant 0 : index
    %456 = vector.load %arg1[%455, %c4_156, %c0_157] : memref<12x12x64xf32, #tpu.memory_space<vmem>>, vector<7x7x64xf32>
    %457 = vector.extract_strided_slice %245 {offsets = [4, 3, 0], sizes = [1, 1, 64], strides = [1, 1, 1]} : vector<5x5x64xf32> to vector<1x1x64xf32>
    %458 = vector.shape_cast %457 : vector<1x1x64xf32> to vector<64xf32>
    %459 = vector.shape_cast %458 : vector<64xf32> to vector<1x1x64xf32>
    %460 = vector.broadcast %459 : vector<1x1x64xf32> to vector<7x7x64xf32>
    %461 = arith.mulf %456, %460 : vector<7x7x64xf32>
    %462 = arith.addf %453, %461 : vector<7x7x64xf32>
    %c4_i32_158 = arith.constant 4 : i32
    %463 = arith.addi %arg0, %c4_i32_158 : i32
    %464 = arith.index_cast %463 : i32 to index
    %c5_159 = arith.constant 5 : index
    %c0_160 = arith.constant 0 : index
    %465 = vector.load %arg1[%464, %c5_159, %c0_160] : memref<12x12x64xf32, #tpu.memory_space<vmem>>, vector<7x7x64xf32>
    %466 = vector.extract_strided_slice %245 {offsets = [4, 4, 0], sizes = [1, 1, 64], strides = [1, 1, 1]} : vector<5x5x64xf32> to vector<1x1x64xf32>
    %467 = vector.shape_cast %466 : vector<1x1x64xf32> to vector<64xf32>
    %468 = vector.shape_cast %467 : vector<64xf32> to vector<1x1x64xf32>
    %469 = vector.broadcast %468 : vector<1x1x64xf32> to vector<7x7x64xf32>
    %470 = arith.mulf %465, %469 : vector<7x7x64xf32>
    %471 = arith.addf %462, %470 : vector<7x7x64xf32>
    %472 = vector.shape_cast %1 : vector<64xf32> to vector<1x1x64xf32>
    %473 = vector.broadcast %472 : vector<1x1x64xf32> to vector<7x7x64xf32>
    %474 = arith.addf %471, %473 : vector<7x7x64xf32>
    %cst_161 = arith.constant 3.000000e+00 : f32
    %475 = vector.broadcast %cst_161 : f32 to vector<7x7x64xf32>
    %476 = arith.addf %474, %475 : vector<7x7x64xf32>
    %cst_162 = arith.constant 0.000000e+00 : f32
    %cst_163 = arith.constant 6.000000e+00 : f32
    %477 = vector.broadcast %cst_162 : f32 to vector<7x7x64xf32>
    %478 = arith.maximumf %477, %476 : vector<7x7x64xf32>
    %479 = vector.broadcast %cst_163 : f32 to vector<7x7x64xf32>
    %480 = arith.minimumf %479, %478 : vector<7x7x64xf32>
    %cst_164 = arith.constant 0.166666672 : f32
    %481 = vector.broadcast %cst_164 : f32 to vector<7x7x64xf32>
    %482 = arith.mulf %480, %481 : vector<7x7x64xf32>
    %c0_165 = arith.constant 0 : index
    %c1_166 = arith.constant 1 : index
    %c0_167 = arith.constant 0 : index
    %c0_168 = arith.constant 0 : index
    %c0_169 = arith.constant 0 : index
    %483 = vector.load %arg4[%c0_165, %c1_166, %c0_167, %c0_168, %c0_169] : memref<1x2x7x7x64xf32, #tpu.memory_space<vmem>>, vector<1x1x7x7x64xf32>
    %484 = vector.shape_cast %483 : vector<1x1x7x7x64xf32> to vector<7x7x64xf32>
    %485 = vector.shape_cast %482 : vector<7x7x64xf32> to vector<1x1x7x7x64xf32>
    tpu.vector_store %arg4[%c0_165, %c1_166, %c0_167, %c0_168, %c0_169], %485 {strides = array<i32>} : memref<1x2x7x7x64xf32, #tpu.memory_space<vmem>>, vector<1x1x7x7x64xf32>,
    return
  }
  func.func @transform_0(%arg0: i32) -> (i32, i32, i32) {
    %c0_i32 = arith.constant 0 : i32
    %c0_i32_0 = arith.constant 0 : i32
    %c0_i32_1 = arith.constant 0 : i32
    %c0_i32_2 = arith.constant 0 : i32
    return %c0_i32, %c0_i32_0, %c0_i32_1 : i32, i32, i32
  }
  func.func @transform_1(%arg0: i32) -> (i32, i32, i32, i32, i32) {
    %c0_i32 = arith.constant 0 : i32
    %c0_i32_0 = arith.constant 0 : i32
    %c0_i32_1 = arith.constant 0 : i32
    %c0_i32_2 = arith.constant 0 : i32
    %c0_i32_3 = arith.constant 0 : i32
    return %arg0, %c0_i32, %c0_i32_0, %c0_i32_1, %c0_i32_2 : i32, i32, i32, i32, i32
  }
  func.func @transform_2(%arg0: i32) -> (i32, i32) {
    %c0_i32 = arith.constant 0 : i32
    %c0_i32_0 = arith.constant 0 : i32
    %c0_i32_1 = arith.constant 0 : i32
    return %c0_i32, %c0_i32_0 : i32, i32
  }
  func.func @transform_3(%arg0: i32) -> (i32, i32, i32, i32, i32) {
    %c0_i32 = arith.constant 0 : i32
    %c0_i32_0 = arith.constant 0 : i32
    %c0_i32_1 = arith.constant 0 : i32
    %c0_i32_2 = arith.constant 0 : i32
    %c0_i32_3 = arith.constant 0 : i32
    return %arg0, %c0_i32, %c0_i32_0, %c0_i32_1, %c0_i32_2 : i32, i32, i32, i32, i32
  }
}

</mosaic_0001>

<llo_original>
// kernel: depthwise_convtranspose_hardsigmoid.1
$region0: #{depthwise_convtranspose_hardsigmoid.1}
  #allocation0 [shape = 'u32[]', space=smem, size = 0x4, offset = 0x4, fixed_abs, tag = 'smem constant byte address 0x4 - core index']
  #allocation1 [shape = 'u32[144,128]{1,0:T(1,128)}', space=vmem, size = 0x12000, scoped, tag = 'internal scratch']
  %s0 = inlined_call_operand.vmem [shape: f32[12,12,64], index: 0, kind: input, shape index: {}]
  %s1 = inlined_call_operand.vmem [shape: f32[2,2,5,5,64], index: 1, kind: input, shape index: {}]
  %s2 = inlined_call_operand.vmem [shape: f32[1,64], index: 2, kind: input, shape index: {}]
  %s3 = inlined_call_operand.vmem [shape: f32[2,2,7,7,64], index: 3, kind: output, shape index: {}]
  %s4 = sld [smem:[#allocation0]]
  $region45: #{depthwise_convtranspose_hardsigmoid.1} parent=0
    _
  %s6 = ssub.s32 1, %s4
  %s7 = scalar_select 0, %s6, %s4
  loop: start=0, step=1, limit=4
  $region2: #{depthwise_convtranspose_hardsigmoid.1} parent=0 // loop_pre_header
    _
  $region3: #{depthwise_convtranspose_hardsigmoid.1} parent=0 // loop_header
    %s9 = sphi 0, %s13
    %p10 = scmp.ge.s32.totalorder %s9, 4
    %s17 = sphi 0, %s17
    %s19 = sphi 0, %s17
    %s20 = sphi 0, %s19
    %s34 = sphi 0, %s20
    %s40 = sphi 0, %s42
    %s43 = sphi 0, %s40
    %s44 = sphi 0, %s43
    %s60 = sphi 0, %s44
    %s64 = sphi 0, %s64
    %s66 = sphi 0, %s64
    %s67 = sphi 0, %s66
    %s81 = sphi 0, %s67
    %s87 = sphi 0, %s89
    %s90 = sphi 0, %s87
    %s91 = sphi 0, %s90
    %s107 = sphi 0, %s91
  $region4: #{depthwise_convtranspose_hardsigmoid.1} parent=0 // loop_header_branch
    %12 = sbr.rel (%p10) target = $region8
  $region5: #{depthwise_convtranspose_hardsigmoid.1} parent=0 // loop_body
    %s14 = ssub.s32 %s9, 1
    %s15 = ssub.s32 %s9, 2
    %s16 = sadd.s32 %s9, 1
    %s18 = sadd.s32 %s17, 1
    %p21 = scmp.eq.s32.totalorder %s9, 1
    %p22 = scmp.ne.s32.totalorder %s17, %s19
    %p23 = scmp.eq.s32.totalorder %s9, 0
    %p24 = por %p22, %p23
    %p25 = scmp.ne.s32.totalorder %s17, %s19
    %p26 = scmp.eq.s32.totalorder %s14, 1
    %p27 = por %p25, %p26
    %p28 = scmp.ne.s32.totalorder %s19, %s20
    %p29 = scmp.eq.s32.totalorder %s14, 0
    %p30 = por %p28, %p29
    %p31 = scmp.ne.s32.totalorder %s19, %s20
    %p32 = scmp.eq.s32.totalorder %s15, 1
    %p33 = por %p31, %p32
    %p35 = scmp.ne.s32.totalorder %s20, %s34
    %p36 = scmp.eq.s32.totalorder %s15, 0
    %p37 = por %p35, %p36
    %s38 = ssub.s32 %s9, %s16
    %p39 = scmp.eq.s32.totalorder %s38, 0
    %s41 = sadd.s32 %s40, 1
    %s42 = scalar_select %p39, %s40, %s41
    %p45 = pneg %p39
    %p46 = scmp.eq.s32.totalorder %s9, 1
    %p47 = por %p45, %p46
    %p48 = scmp.ne.s32.totalorder %s40, %s43
    %p49 = scmp.eq.s32.totalorder %s9, 0
    %p50 = por %p48, %p49
    %p51 = scmp.ne.s32.totalorder %s40, %s43
    %p52 = scmp.eq.s32.totalorder %s14, 1
    %p53 = por %p51, %p52
    %p54 = scmp.ne.s32.totalorder %s43, %s44
    %p55 = scmp.eq.s32.totalorder %s14, 0
    %p56 = por %p54, %p55
    %p57 = scmp.ne.s32.totalorder %s43, %s44
    %p58 = scmp.eq.s32.totalorder %s15, 1
    %p59 = por %p57, %p58
    %p61 = scmp.ne.s32.totalorder %s44, %s60
    %p62 = scmp.eq.s32.totalorder %s15, 0
    %p63 = por %p61, %p62
    %s65 = sadd.s32 %s64, 1
    %p68 = scmp.eq.s32.totalorder %s9, 1
    %p69 = scmp.ne.s32.totalorder %s64, %s66
    %p70 = scmp.eq.s32.totalorder %s9, 0
    %p71 = por %p69, %p70
    %p72 = scmp.ne.s32.totalorder %s64, %s66
    %p73 = scmp.eq.s32.totalorder %s14, 1
    %p74 = por %p72, %p73
    %p75 = scmp.ne.s32.totalorder %s66, %s67
    %p76 = scmp.eq.s32.totalorder %s14, 0
    %p77 = por %p75, %p76
    %p78 = scmp.ne.s32.totalorder %s66, %s67
    %p79 = scmp.eq.s32.totalorder %s15, 1
    %p80 = por %p78, %p79
    %p82 = scmp.ne.s32.totalorder %s67, %s81
    %p83 = scmp.eq.s32.totalorder %s15, 0
    %p84 = por %p82, %p83
    %s85 = ssub.s32 %s9, %s16
    %p86 = scmp.eq.s32.totalorder %s85, 0
    %s88 = sadd.s32 %s87, 1
    %s89 = scalar_select %p86, %s87, %s88
    %p92 = pneg %p86
    %p93 = scmp.eq.s32.totalorder %s9, 1
    %p94 = por %p92, %p93
    %p95 = scmp.ne.s32.totalorder %s87, %s90
    %p96 = scmp.eq.s32.totalorder %s9, 0
    %p97 = por %p95, %p96
    %p98 = scmp.ne.s32.totalorder %s87, %s90
    %p99 = scmp.eq.s32.totalorder %s14, 1
    %p100 = por %p98, %p99
    %p101 = scmp.ne.s32.totalorder %s90, %s91
    %p102 = scmp.eq.s32.totalorder %s14, 0
    %p103 = por %p101, %p102
    %p104 = scmp.ne.s32.totalorder %s90, %s91
    %p105 = scmp.eq.s32.totalorder %s15, 1
    %p106 = por %p104, %p105
    %p108 = scmp.ne.s32.totalorder %s91, %s107
    %p109 = scmp.eq.s32.totalorder %s15, 0
    %p110 = por %p108, %p109
    %p111 = scmp.le.s32.totalorder 1, %s9
    %p112 = scmp.lt.s32.totalorder %s9, 3
    %p113 = pnand %p111, %p112
    %p114 = pneg %p113
    // Predicated region
    $region9: #{depthwise_convtranspose_hardsigmoid.1} parent=5 // pred_check
      _
    $region10: #{depthwise_convtranspose_hardsigmoid.1} parent=5 // pred_check_branch
      %116 = sbr.rel (%p113) target = $region12
    $region11: #{depthwise_convtranspose_hardsigmoid.1} parent=5 // pred_region
      %s117 = ssub.s32 %s9, 1
      // Predicated region
      $region13: #{depthwise_convtranspose_hardsigmoid.1} parent=11 // pred_check
        %p118 = pneg %p30
      $region14: #{depthwise_convtranspose_hardsigmoid.1} parent=11 // pred_check_branch
        %120 = sbr.rel (%p118) target = $region16
      $region15: #{depthwise_convtranspose_hardsigmoid.1} parent=11 // pred_region
        _
      $region16: #{depthwise_convtranspose_hardsigmoid.1} parent=11 // pred_fallthru
        _
      // Predicated region
      $region17: #{depthwise_convtranspose_hardsigmoid.1} parent=11 // pred_check
        %p121 = pneg %p77
      $region18: #{depthwise_convtranspose_hardsigmoid.1} parent=11 // pred_check_branch
        %123 = sbr.rel (%p121) target = $region20
      $region19: #{depthwise_convtranspose_hardsigmoid.1} parent=11 // pred_region
        _
      $region20: #{depthwise_convtranspose_hardsigmoid.1} parent=11 // pred_fallthru
        _
    $region12: #{depthwise_convtranspose_hardsigmoid.1} parent=5 // pred_fallthru
      _
    %p124 = scmp.lt.s32.totalorder %s9, 2
    // Predicated region
    $region21: #{depthwise_convtranspose_hardsigmoid.1} parent=5 // pred_check
      %p125 = pneg %p124
    $region22: #{depthwise_convtranspose_hardsigmoid.1} parent=5 // pred_check_branch
      %127 = sbr.rel (%p125) target = $region24
    $region23: #{depthwise_convtranspose_hardsigmoid.1} parent=5 // pred_region
      // Predicated region
      $region25: #{depthwise_convtranspose_hardsigmoid.1} parent=23 // pred_check
        %p128 = pneg %p50
      $region26: #{depthwise_convtranspose_hardsigmoid.1} parent=23 // pred_check_branch
        %130 = sbr.rel (%p128) target = $region28
      $region27: #{depthwise_convtranspose_hardsigmoid.1} parent=23 // pred_region
        %p131 = scmp.lt.s32.totalorder %s9, 1
        %s132 = scalar_select %p131, %s9, 1
        %s133 = smul.addr %s132, 10
        %s134 = smul.addr %s133, 8
        %s135 = scalar_lea.vmem %s1, %s134
      $region28: #{depthwise_convtranspose_hardsigmoid.1} parent=23 // pred_fallthru
        _
    $region24: #{depthwise_convtranspose_hardsigmoid.1} parent=5 // pred_fallthru
      _
    %p136 = scmp.le.s32.totalorder 1, %s9
    %p137 = scmp.lt.s32.totalorder %s9, 3
    %p138 = pnand %p136, %p137
    %p139 = pneg %p138
    // Predicated region
    $region29: #{depthwise_convtranspose_hardsigmoid.1} parent=5 // pred_check
      _
    $region30: #{depthwise_convtranspose_hardsigmoid.1} parent=5 // pred_check_branch
      %141 = sbr.rel (%p138) target = $region32
    $region31: #{depthwise_convtranspose_hardsigmoid.1} parent=5 // pred_region
      %s142 = ssub.s32 %s9, 1
      %p143 = pneg %p30
      %p144 = pneg %p27
      %p145 = scmp.lt.s32.totalorder %s14, 1
      %s146 = scalar_select %p145, %s14, 1
      %s147 = smul.addr %s146, 10
      %s148 = smul.addr %s147, 8
      %s149 = scalar_lea.vmem %s1, %s148
      %p150 = pneg %p56
      %p151 = pneg %p53
      %p152 = pneg %p77
      %p153 = pneg %p74
      %p154 = pneg %p103
      %p155 = pneg %p100
      %p156 = scmp.lt.s32.totalorder %s14, 1
      %s157 = scalar_select %p156, %s14, 1
      %s158 = smul.addr %s157, 14
      %s159 = smul.addr %s158, 8
      %s160 = scalar_lea.vmem %s3, %s159
      %p161 = scmp.lt.s32.totalorder %s14, 1
      %s162 = scalar_select %p161, %s14, 1
      %s163 = smul.addr %s162, 10
      %s164 = smul.addr %s163, 8
      %s165 = scalar_lea.vmem %s1, %s164
      %p166 = scmp.lt.s32.totalorder %s14, 1
      %s167 = scalar_select %p166, %s14, 1
      %s168 = smul.addr %s167, 14
      %s169 = smul.addr %s168, 8
      %s170 = scalar_lea.vmem %s3, %s169
      %v171 = vld [vmem:[%s2] sm:$0x1]
      %v172 = vld [vmem:[%s165] sm:$0x1f]
      %v173 = vld [vmem:[%s165 + $0x8] sm:$0x1f]
      %v174 = vld [vmem:[%s165 + $0x10] sm:$0x1f]
      %v175 = vld [vmem:[%s165 + $0x18] sm:$0x1f]
      %v176 = vld [vmem:[%s165 + $0x20] sm:$0x1f]
      %s177 = smul.u32 %s14, 16
      %s178 = scalar_lea.vmem %s0, %s177
      %v179 = vld [vmem:[%s178] sm:$0x7f]
      %v180 = vld [vmem:[%s178 + $0x10] sm:$0x7f]
      %v181 = vld [vmem:[%s178 + $0x20] sm:$0x7f]
      %v182 = vld [vmem:[%s178 + $0x30] sm:$0x7f]
      %v183 = vld [vmem:[%s178 + $0x40] sm:$0x7f]
      %v184 = vld [vmem:[%s178 + $0x50] sm:$0x7f]
      %v185 = vld [vmem:[%s178 + $0x60] sm:$0x7f]
      %v186 = vlaneseq
      %v187 = vshrl.u32 %v186, 7
      %v188 = vsub.s32 0, %v187
      %v189 = vrot.slane %v172, %v188
      %v190 = vmul.f32 %v179, %v189
      %v191 = vmul.f32 %v180, %v189
      %v192 = vmul.f32 %v181, %v189
      %v193 = vmul.f32 %v182, %v189
      %v194 = vmul.f32 %v183, %v189
      %v195 = vmul.f32 %v184, %v189
      %v196 = vmul.f32 %v185, %v189
      %v197 = vadd.f32 %v190, 0.0
      %v198 = vadd.f32 %v191, 0.0
      %v199 = vadd.f32 %v192, 0.0
      %v200 = vadd.f32 %v193, 0.0
      %v201 = vadd.f32 %v194, 0.0
      %v202 = vadd.f32 %v195, 0.0
      %v203 = vadd.f32 %v196, 0.0
      %v204 = vld [vmem:[%s178 + $0x1] sm:$0x7f]
      %v205 = vld [vmem:[%s178 + $0x11] sm:$0x7f]
      %v206 = vld [vmem:[%s178 + $0x21] sm:$0x7f]
      %v207 = vld [vmem:[%s178 + $0x31] sm:$0x7f]
      %v208 = vld [vmem:[%s178 + $0x41] sm:$0x7f]
      %v209 = vld [vmem:[%s178 + $0x51] sm:$0x7f]
      %v210 = vld [vmem:[%s178 + $0x61] sm:$0x7f]
      %v211 = vlaneseq
      %v212 = vshrl.u32 %v211, 7
      %v213 = vsub.s32 1, %v212
      %v214 = vrot.slane %v172, %v213
      %v215 = vmul.f32 %v204, %v214
      %v216 = vmul.f32 %v205, %v214
      %v217 = vmul.f32 %v206, %v214
      %v218 = vmul.f32 %v207, %v214
      %v219 = vmul.f32 %v208, %v214
      %v220 = vmul.f32 %v209, %v214
      %v221 = vmul.f32 %v210, %v214
      %v222 = vadd.f32 %v197, %v215
      %v223 = vadd.f32 %v198, %v216
      %v224 = vadd.f32 %v199, %v217
      %v225 = vadd.f32 %v200, %v218
      %v226 = vadd.f32 %v201, %v219
      %v227 = vadd.f32 %v202, %v220
      %v228 = vadd.f32 %v203, %v221
      %v229 = vld [vmem:[%s178 + $0x2] sm:$0x7f]
      %v230 = vld [vmem:[%s178 + $0x12] sm:$0x7f]
      %v231 = vld [vmem:[%s178 + $0x22] sm:$0x7f]
      %v232 = vld [vmem:[%s178 + $0x32] sm:$0x7f]
      %v233 = vld [vmem:[%s178 + $0x42] sm:$0x7f]
      %v234 = vld [vmem:[%s178 + $0x52] sm:$0x7f]
      %v235 = vld [vmem:[%s178 + $0x62] sm:$0x7f]
      %v236 = vlaneseq
      %v237 = vshrl.u32 %v236, 7
      %v238 = vsub.s32 2, %v237
      %v239 = vrot.slane %v172, %v238
      %v240 = vmul.f32 %v229, %v239
      %v241 = vmul.f32 %v230, %v239
      %v242 = vmul.f32 %v231, %v239
      %v243 = vmul.f32 %v232, %v239
      %v244 = vmul.f32 %v233, %v239
      %v245 = vmul.f32 %v234, %v239
      %v246 = vmul.f32 %v235, %v239
      %v247 = vadd.f32 %v222, %v240
      %v248 = vadd.f32 %v223, %v241
      %v249 = vadd.f32 %v224, %v242
      %v250 = vadd.f32 %v225, %v243
      %v251 = vadd.f32 %v226, %v244
      %v252 = vadd.f32 %v227, %v245
      %v253 = vadd.f32 %v228, %v246
      %v254 = vld [vmem:[%s178 + $0x3] sm:$0x7f]
      %v255 = vld [vmem:[%s178 + $0x13] sm:$0x7f]
      %v256 = vld [vmem:[%s178 + $0x23] sm:$0x7f]
      %v257 = vld [vmem:[%s178 + $0x33] sm:$0x7f]
      %v258 = vld [vmem:[%s178 + $0x43] sm:$0x7f]
      %v259 = vld [vmem:[%s178 + $0x53] sm:$0x7f]
      %v260 = vld [vmem:[%s178 + $0x63] sm:$0x7f]
      %v261 = vlaneseq
      %v262 = vshrl.u32 %v261, 7
      %v263 = vsub.s32 3, %v262
      %v264 = vrot.slane %v172, %v263
      %v265 = vmul.f32 %v254, %v264
      %v266 = vmul.f32 %v255, %v264
      %v267 = vmul.f32 %v256, %v264
      %v268 = vmul.f32 %v257, %v264
      %v269 = vmul.f32 %v258, %v264
      %v270 = vmul.f32 %v259, %v264
      %v271 = vmul.f32 %v260, %v264
      %v272 = vadd.f32 %v247, %v265
      %v273 = vadd.f32 %v248, %v266
      %v274 = vadd.f32 %v249, %v267
      %v275 = vadd.f32 %v250, %v268
      %v276 = vadd.f32 %v251, %v269
      %v277 = vadd.f32 %v252, %v270
      %v278 = vadd.f32 %v253, %v271
      %v279 = vld [vmem:[%s178 + $0x4] sm:$0x7f]
      %v280 = vld [vmem:[%s178 + $0x14] sm:$0x7f]
      %v281 = vld [vmem:[%s178 + $0x24] sm:$0x7f]
      %v282 = vld [vmem:[%s178 + $0x34] sm:$0x7f]
      %v283 = vld [vmem:[%s178 + $0x44] sm:$0x7f]
      %v284 = vld [vmem:[%s178 + $0x54] sm:$0x7f]
      %v285 = vld [vmem:[%s178 + $0x64] sm:$0x7f]
      %v286 = vlaneseq
      %v287 = vshrl.u32 %v286, 7
      %v288 = vsub.s32 4, %v287
      %v289 = vrot.slane %v172, %v288
      %v290 = vmul.f32 %v279, %v289
      %v291 = vmul.f32 %v280, %v289
      %v292 = vmul.f32 %v281, %v289
      %v293 = vmul.f32 %v282, %v289
      %v294 = vmul.f32 %v283, %v289
      %v295 = vmul.f32 %v284, %v289
      %v296 = vmul.f32 %v285, %v289
      %v297 = vadd.f32 %v272, %v290
      %v298 = vadd.f32 %v273, %v291
      %v299 = vadd.f32 %v274, %v292
      %v300 = vadd.f32 %v275, %v293
      %v301 = vadd.f32 %v276, %v294
      %v302 = vadd.f32 %v277, %v295
      %v303 = vadd.f32 %v278, %v296
      %s304 = sadd.s32 %s14, 1
      %s305 = smul.u32 %s304, 16
      %s306 = scalar_lea.vmem %s0, %s305
      %v307 = vld [vmem:[%s306] sm:$0x7f]
      %v308 = vld [vmem:[%s306 + $0x10] sm:$0x7f]
      %v309 = vld [vmem:[%s306 + $0x20] sm:$0x7f]
      %v310 = vld [vmem:[%s306 + $0x30] sm:$0x7f]
      %v311 = vld [vmem:[%s306 + $0x40] sm:$0x7f]
      %v312 = vld [vmem:[%s306 + $0x50] sm:$0x7f]
      %v313 = vld [vmem:[%s306 + $0x60] sm:$0x7f]
      %v314 = vlaneseq
      %v315 = vshrl.u32 %v314, 7
      %v316 = vsub.s32 0, %v315
      %v317 = vrot.slane %v173, %v316
      %v318 = vmul.f32 %v307, %v317
      %v319 = vmul.f32 %v308, %v317
      %v320 = vmul.f32 %v309, %v317
      %v321 = vmul.f32 %v310, %v317
      %v322 = vmul.f32 %v311, %v317
      %v323 = vmul.f32 %v312, %v317
      %v324 = vmul.f32 %v313, %v317
      %v325 = vadd.f32 %v297, %v318
      %v326 = vadd.f32 %v298, %v319
      %v327 = vadd.f32 %v299, %v320
      %v328 = vadd.f32 %v300, %v321
      %v329 = vadd.f32 %v301, %v322
      %v330 = vadd.f32 %v302, %v323
      %v331 = vadd.f32 %v303, %v324
      %v332 = vld [vmem:[%s306 + $0x1] sm:$0x7f]
      %v333 = vld [vmem:[%s306 + $0x11] sm:$0x7f]
      %v334 = vld [vmem:[%s306 + $0x21] sm:$0x7f]
      %v335 = vld [vmem:[%s306 + $0x31] sm:$0x7f]
      %v336 = vld [vmem:[%s306 + $0x41] sm:$0x7f]
      %v337 = vld [vmem:[%s306 + $0x51] sm:$0x7f]
      %v338 = vld [vmem:[%s306 + $0x61] sm:$0x7f]
      %v339 = vlaneseq
      %v340 = vshrl.u32 %v339, 7
      %v341 = vsub.s32 1, %v340
      %v342 = vrot.slane %v173, %v341
      %v343 = vmul.f32 %v332, %v342
      %v344 = vmul.f32 %v333, %v342
      %v345 = vmul.f32 %v334, %v342
      %v346 = vmul.f32 %v335, %v342
      %v347 = vmul.f32 %v336, %v342
      %v348 = vmul.f32 %v337, %v342
      %v349 = vmul.f32 %v338, %v342
      %v350 = vadd.f32 %v325, %v343
      %v351 = vadd.f32 %v326, %v344
      %v352 = vadd.f32 %v327, %v345
      %v353 = vadd.f32 %v328, %v346
      %v354 = vadd.f32 %v329, %v347
      %v355 = vadd.f32 %v330, %v348
      %v356 = vadd.f32 %v331, %v349
      %v357 = vld [vmem:[%s306 + $0x2] sm:$0x7f]
      %v358 = vld [vmem:[%s306 + $0x12] sm:$0x7f]
      %v359 = vld [vmem:[%s306 + $0x22] sm:$0x7f]
      %v360 = vld [vmem:[%s306 + $0x32] sm:$0x7f]
      %v361 = vld [vmem:[%s306 + $0x42] sm:$0x7f]
      %v362 = vld [vmem:[%s306 + $0x52] sm:$0x7f]
      %v363 = vld [vmem:[%s306 + $0x62] sm:$0x7f]
      %v364 = vlaneseq
      %v365 = vshrl.u32 %v364, 7
      %v366 = vsub.s32 2, %v365
      %v367 = vrot.slane %v173, %v366
      %v368 = vmul.f32 %v357, %v367
      %v369 = vmul.f32 %v358, %v367
      %v370 = vmul.f32 %v359, %v367
      %v371 = vmul.f32 %v360, %v367
      %v372 = vmul.f32 %v361, %v367
      %v373 = vmul.f32 %v362, %v367
      %v374 = vmul.f32 %v363, %v367
      %v375 = vadd.f32 %v350, %v368
      %v376 = vadd.f32 %v351, %v369
      %v377 = vadd.f32 %v352, %v370
      %v378 = vadd.f32 %v353, %v371
      %v379 = vadd.f32 %v354, %v372
      %v380 = vadd.f32 %v355, %v373
      %v381 = vadd.f32 %v356, %v374
      %v382 = vld [vmem:[%s306 + $0x3] sm:$0x7f]
      %v383 = vld [vmem:[%s306 + $0x13] sm:$0x7f]
      %v384 = vld [vmem:[%s306 + $0x23] sm:$0x7f]
      %v385 = vld [vmem:[%s306 + $0x33] sm:$0x7f]
      %v386 = vld [vmem:[%s306 + $0x43] sm:$0x7f]
      %v387 = vld [vmem:[%s306 + $0x53] sm:$0x7f]
      %v388 = vld [vmem:[%s306 + $0x63] sm:$0x7f]
      %v389 = vlaneseq
      %v390 = vshrl.u32 %v389, 7
      %v391 = vsub.s32 3, %v390
      %v392 = vrot.slane %v173, %v391
      %v393 = vmul.f32 %v382, %v392
      %v394 = vmul.f32 %v383, %v392
      %v395 = vmul.f32 %v384, %v392
      %v396 = vmul.f32 %v385, %v392
      %v397 = vmul.f32 %v386, %v392
      %v398 = vmul.f32 %v387, %v392
      %v399 = vmul.f32 %v388, %v392
      %v400 = vadd.f32 %v375, %v393
      %v401 = vadd.f32 %v376, %v394
      %v402 = vadd.f32 %v377, %v395
      %v403 = vadd.f32 %v378, %v396
      %v404 = vadd.f32 %v379, %v397
      %v405 = vadd.f32 %v380, %v398
      %v406 = vadd.f32 %v381, %v399
      %v407 = vld [vmem:[%s306 + $0x4] sm:$0x7f]
      %v408 = vld [vmem:[%s306 + $0x14] sm:$0x7f]
      %v409 = vld [vmem:[%s306 + $0x24] sm:$0x7f]
      %v410 = vld [vmem:[%s306 + $0x34] sm:$0x7f]
      %v411 = vld [vmem:[%s306 + $0x44] sm:$0x7f]
      %v412 = vld [vmem:[%s306 + $0x54] sm:$0x7f]
      %v413 = vld [vmem:[%s306 + $0x64] sm:$0x7f]
      %v414 = vlaneseq
      %v415 = vshrl.u32 %v414, 7
      %v416 = vsub.s32 4, %v415
      %v417 = vrot.slane %v173, %v416
      %v418 = vmul.f32 %v407, %v417
      %v419 = vmul.f32 %v408, %v417
      %v420 = vmul.f32 %v409, %v417
      %v421 = vmul.f32 %v410, %v417
      %v422 = vmul.f32 %v411, %v417
      %v423 = vmul.f32 %v412, %v417
      %v424 = vmul.f32 %v413, %v417
      %v425 = vadd.f32 %v400, %v418
      %v426 = vadd.f32 %v401, %v419
      %v427 = vadd.f32 %v402, %v420
      %v428 = vadd.f32 %v403, %v421
      %v429 = vadd.f32 %v404, %v422
      %v430 = vadd.f32 %v405, %v423
      %v431 = vadd.f32 %v406, %v424
      %s432 = sadd.s32 %s14, 2
      %s433 = smul.u32 %s432, 16
      %s434 = scalar_lea.vmem %s0, %s433
      %v435 = vld [vmem:[%s434] sm:$0x7f]
      %v436 = vld [vmem:[%s434 + $0x10] sm:$0x7f]
      %v437 = vld [vmem:[%s434 + $0x20] sm:$0x7f]
      %v438 = vld [vmem:[%s434 + $0x30] sm:$0x7f]
      %v439 = vld [vmem:[%s434 + $0x40] sm:$0x7f]
      %v440 = vld [vmem:[%s434 + $0x50] sm:$0x7f]
      %v441 = vld [vmem:[%s434 + $0x60] sm:$0x7f]
      %v442 = vlaneseq
      %v443 = vshrl.u32 %v442, 7
      %v444 = vsub.s32 0, %v443
      %v445 = vrot.slane %v174, %v444
      %v446 = vmul.f32 %v435, %v445
      %v447 = vmul.f32 %v436, %v445
      %v448 = vmul.f32 %v437, %v445
      %v449 = vmul.f32 %v438, %v445
      %v450 = vmul.f32 %v439, %v445
      %v451 = vmul.f32 %v440, %v445
      %v452 = vmul.f32 %v441, %v445
      %v453 = vadd.f32 %v425, %v446
      %v454 = vadd.f32 %v426, %v447
      %v455 = vadd.f32 %v427, %v448
      %v456 = vadd.f32 %v428, %v449
      %v457 = vadd.f32 %v429, %v450
      %v458 = vadd.f32 %v430, %v451
      %v459 = vadd.f32 %v431, %v452
      %v460 = vld [vmem:[%s434 + $0x1] sm:$0x7f]
      %v461 = vld [vmem:[%s434 + $0x11] sm:$0x7f]
      %v462 = vld [vmem:[%s434 + $0x21] sm:$0x7f]
      %v463 = vld [vmem:[%s434 + $0x31] sm:$0x7f]
      %v464 = vld [vmem:[%s434 + $0x41] sm:$0x7f]
      %v465 = vld [vmem:[%s434 + $0x51] sm:$0x7f]
      %v466 = vld [vmem:[%s434 + $0x61] sm:$0x7f]
      %v467 = vlaneseq
      %v468 = vshrl.u32 %v467, 7
      %v469 = vsub.s32 1, %v468
      %v470 = vrot.slane %v174, %v469
      %v471 = vmul.f32 %v460, %v470
      %v472 = vmul.f32 %v461, %v470
      %v473 = vmul.f32 %v462, %v470
      %v474 = vmul.f32 %v463, %v470
      %v475 = vmul.f32 %v464, %v470
      %v476 = vmul.f32 %v465, %v470
      %v477 = vmul.f32 %v466, %v470
      %v478 = vadd.f32 %v453, %v471
      %v479 = vadd.f32 %v454, %v472
      %v480 = vadd.f32 %v455, %v473
      %v481 = vadd.f32 %v456, %v474
      %v482 = vadd.f32 %v457, %v475
      %v483 = vadd.f32 %v458, %v476
      %v484 = vadd.f32 %v459, %v477
      %v485 = vld [vmem:[%s434 + $0x2] sm:$0x7f]
      %v486 = vld [vmem:[%s434 + $0x12] sm:$0x7f]
      %v487 = vld [vmem:[%s434 + $0x22] sm:$0x7f]
      %v488 = vld [vmem:[%s434 + $0x32] sm:$0x7f]
      %v489 = vld [vmem:[%s434 + $0x42] sm:$0x7f]
      %v490 = vld [vmem:[%s434 + $0x52] sm:$0x7f]
      %v491 = vld [vmem:[%s434 + $0x62] sm:$0x7f]
      %v492 = vlaneseq
      %v493 = vshrl.u32 %v492, 7
      %v494 = vsub.s32 2, %v493
      %v495 = vrot.slane %v174, %v494
      %v496 = vmul.f32 %v485, %v495
      %v497 = vmul.f32 %v486, %v495
      %v498 = vmul.f32 %v487, %v495
      %v499 = vmul.f32 %v488, %v495
      %v500 = vmul.f32 %v489, %v495
      %v501 = vmul.f32 %v490, %v495
      %v502 = vmul.f32 %v491, %v495
      %v503 = vadd.f32 %v478, %v496
      %v504 = vadd.f32 %v479, %v497
      %v505 = vadd.f32 %v480, %v498
      %v506 = vadd.f32 %v481, %v499
      %v507 = vadd.f32 %v482, %v500
      %v508 = vadd.f32 %v483, %v501
      %v509 = vadd.f32 %v484, %v502
      %v510 = vld [vmem:[%s434 + $0x3] sm:$0x7f]
      %v511 = vld [vmem:[%s434 + $0x13] sm:$0x7f]
      %v512 = vld [vmem:[%s434 + $0x23] sm:$0x7f]
      %v513 = vld [vmem:[%s434 + $0x33] sm:$0x7f]
      %v514 = vld [vmem:[%s434 + $0x43] sm:$0x7f]
      %v515 = vld [vmem:[%s434 + $0x53] sm:$0x7f]
      %v516 = vld [vmem:[%s434 + $0x63] sm:$0x7f]
      %v517 = vlaneseq
      %v518 = vshrl.u32 %v517, 7
      %v519 = vsub.s32 3, %v518
      %v520 = vrot.slane %v174, %v519
      %v521 = vmul.f32 %v510, %v520
      %v522 = vmul.f32 %v511, %v520
      %v523 = vmul.f32 %v512, %v520
      %v524 = vmul.f32 %v513, %v520
      %v525 = vmul.f32 %v514, %v520
      %v526 = vmul.f32 %v515, %v520
      %v527 = vmul.f32 %v516, %v520
      %v528 = vadd.f32 %v503, %v521
      %v529 = vadd.f32 %v504, %v522
      %v530 = vadd.f32 %v505, %v523
      %v531 = vadd.f32 %v506, %v524
      %v532 = vadd.f32 %v507, %v525
      %v533 = vadd.f32 %v508, %v526
      %v534 = vadd.f32 %v509, %v527
      %v535 = vld [vmem:[%s434 + $0x4] sm:$0x7f]
      %v536 = vld [vmem:[%s434 + $0x14] sm:$0x7f]
      %v537 = vld [vmem:[%s434 + $0x24] sm:$0x7f]
      %v538 = vld [vmem:[%s434 + $0x34] sm:$0x7f]
      %v539 = vld [vmem:[%s434 + $0x44] sm:$0x7f]
      %v540 = vld [vmem:[%s434 + $0x54] sm:$0x7f]
      %v541 = vld [vmem:[%s434 + $0x64] sm:$0x7f]
      %v542 = vlaneseq
      %v543 = vshrl.u32 %v542, 7
      %v544 = vsub.s32 4, %v543
      %v545 = vrot.slane %v174, %v544
      %v546 = vmul.f32 %v535, %v545
      %v547 = vmul.f32 %v536, %v545
      %v548 = vmul.f32 %v537, %v545
      %v549 = vmul.f32 %v538, %v545
      %v550 = vmul.f32 %v539, %v545
      %v551 = vmul.f32 %v540, %v545
      %v552 = vmul.f32 %v541, %v545
      %v553 = vadd.f32 %v528, %v546
      %v554 = vadd.f32 %v529, %v547
      %v555 = vadd.f32 %v530, %v548
      %v556 = vadd.f32 %v531, %v549
      %v557 = vadd.f32 %v532, %v550
      %v558 = vadd.f32 %v533, %v551
      %v559 = vadd.f32 %v534, %v552
      %s560 = sadd.s32 %s14, 3
      %s561 = smul.u32 %s560, 16
      %s562 = scalar_lea.vmem %s0, %s561
      %v563 = vld [vmem:[%s562] sm:$0x7f]
      %v564 = vld [vmem:[%s562 + $0x10] sm:$0x7f]
      %v565 = vld [vmem:[%s562 + $0x20] sm:$0x7f]
      %v566 = vld [vmem:[%s562 + $0x30] sm:$0x7f]
      %v567 = vld [vmem:[%s562 + $0x40] sm:$0x7f]
      %v568 = vld [vmem:[%s562 + $0x50] sm:$0x7f]
      %v569 = vld [vmem:[%s562 + $0x60] sm:$0x7f]
      %v570 = vlaneseq
      %v571 = vshrl.u32 %v570, 7
      %v572 = vsub.s32 0, %v571
      %v573 = vrot.slane %v175, %v572
      %v574 = vmul.f32 %v563, %v573
      %v575 = vmul.f32 %v564, %v573
      %v576 = vmul.f32 %v565, %v573
      %v577 = vmul.f32 %v566, %v573
      %v578 = vmul.f32 %v567, %v573
      %v579 = vmul.f32 %v568, %v573
      %v580 = vmul.f32 %v569, %v573
      %v581 = vadd.f32 %v553, %v574
      %v582 = vadd.f32 %v554, %v575
      %v583 = vadd.f32 %v555, %v576
      %v584 = vadd.f32 %v556, %v577
      %v585 = vadd.f32 %v557, %v578
      %v586 = vadd.f32 %v558, %v579
      %v587 = vadd.f32 %v559, %v580
      %v588 = vld [vmem:[%s562 + $0x1] sm:$0x7f]
      %v589 = vld [vmem:[%s562 + $0x11] sm:$0x7f]
      %v590 = vld [vmem:[%s562 + $0x21] sm:$0x7f]
      %v591 = vld [vmem:[%s562 + $0x31] sm:$0x7f]
      %v592 = vld [vmem:[%s562 + $0x41] sm:$0x7f]
      %v593 = vld [vmem:[%s562 + $0x51] sm:$0x7f]
      %v594 = vld [vmem:[%s562 + $0x61] sm:$0x7f]
      %v595 = vlaneseq
      %v596 = vshrl.u32 %v595, 7
      %v597 = vsub.s32 1, %v596
      %v598 = vrot.slane %v175, %v597
      %v599 = vmul.f32 %v588, %v598
      %v600 = vmul.f32 %v589, %v598
      %v601 = vmul.f32 %v590, %v598
      %v602 = vmul.f32 %v591, %v598
      %v603 = vmul.f32 %v592, %v598
      %v604 = vmul.f32 %v593, %v598
      %v605 = vmul.f32 %v594, %v598
      %v606 = vadd.f32 %v581, %v599
      %v607 = vadd.f32 %v582, %v600
      %v608 = vadd.f32 %v583, %v601
      %v609 = vadd.f32 %v584, %v602
      %v610 = vadd.f32 %v585, %v603
      %v611 = vadd.f32 %v586, %v604
      %v612 = vadd.f32 %v587, %v605
      %v613 = vld [vmem:[%s562 + $0x2] sm:$0x7f]
      %v614 = vld [vmem:[%s562 + $0x12] sm:$0x7f]
      %v615 = vld [vmem:[%s562 + $0x22] sm:$0x7f]
      %v616 = vld [vmem:[%s562 + $0x32] sm:$0x7f]
      %v617 = vld [vmem:[%s562 + $0x42] sm:$0x7f]
      %v618 = vld [vmem:[%s562 + $0x52] sm:$0x7f]
      %v619 = vld [vmem:[%s562 + $0x62] sm:$0x7f]
      %v620 = vlaneseq
      %v621 = vshrl.u32 %v620, 7
      %v622 = vsub.s32 2, %v621
      %v623 = vrot.slane %v175, %v622
      %v624 = vmul.f32 %v613, %v623
      %v625 = vmul.f32 %v614, %v623
      %v626 = vmul.f32 %v615, %v623
      %v627 = vmul.f32 %v616, %v623
      %v628 = vmul.f32 %v617, %v623
      %v629 = vmul.f32 %v618, %v623
      %v630 = vmul.f32 %v619, %v623
      %v631 = vadd.f32 %v606, %v624
      %v632 = vadd.f32 %v607, %v625
      %v633 = vadd.f32 %v608, %v626
      %v634 = vadd.f32 %v609, %v627
      %v635 = vadd.f32 %v610, %v628
      %v636 = vadd.f32 %v611, %v629
      %v637 = vadd.f32 %v612, %v630
      %v638 = vld [vmem:[%s562 + $0x3] sm:$0x7f]
      %v639 = vld [vmem:[%s562 + $0x13] sm:$0x7f]
      %v640 = vld [vmem:[%s562 + $0x23] sm:$0x7f]
      %v641 = vld [vmem:[%s562 + $0x33] sm:$0x7f]
      %v642 = vld [vmem:[%s562 + $0x43] sm:$0x7f]
      %v643 = vld [vmem:[%s562 + $0x53] sm:$0x7f]
      %v644 = vld [vmem:[%s562 + $0x63] sm:$0x7f]
      %v645 = vlaneseq
      %v646 = vshrl.u32 %v645, 7
      %v647 = vsub.s32 3, %v646
      %v648 = vrot.slane %v175, %v647
      %v649 = vmul.f32 %v638, %v648
      %v650 = vmul.f32 %v639, %v648
      %v651 = vmul.f32 %v640, %v648
      %v652 = vmul.f32 %v641, %v648
      %v653 = vmul.f32 %v642, %v648
      %v654 = vmul.f32 %v643, %v648
      %v655 = vmul.f32 %v644, %v648
      %v656 = vadd.f32 %v631, %v649
      %v657 = vadd.f32 %v632, %v650
      %v658 = vadd.f32 %v633, %v651
      %v659 = vadd.f32 %v634, %v652
      %v660 = vadd.f32 %v635, %v653
      %v661 = vadd.f32 %v636, %v654
      %v662 = vadd.f32 %v637, %v655
      %v663 = vld [vmem:[%s562 + $0x4] sm:$0x7f]
      %v664 = vld [vmem:[%s562 + $0x14] sm:$0x7f]
      %v665 = vld [vmem:[%s562 + $0x24] sm:$0x7f]
      %v666 = vld [vmem:[%s562 + $0x34] sm:$0x7f]
      %v667 = vld [vmem:[%s562 + $0x44] sm:$0x7f]
      %v668 = vld [vmem:[%s562 + $0x54] sm:$0x7f]
      %v669 = vld [vmem:[%s562 + $0x64] sm:$0x7f]
      %v670 = vlaneseq
      %v671 = vshrl.u32 %v670, 7
      %v672 = vsub.s32 4, %v671
      %v673 = vrot.slane %v175, %v672
      %v674 = vmul.f32 %v663, %v673
      %v675 = vmul.f32 %v664, %v673
      %v676 = vmul.f32 %v665, %v673
      %v677 = vmul.f32 %v666, %v673
      %v678 = vmul.f32 %v667, %v673
      %v679 = vmul.f32 %v668, %v673
      %v680 = vmul.f32 %v669, %v673
      %v681 = vadd.f32 %v656, %v674
      %v682 = vadd.f32 %v657, %v675
      %v683 = vadd.f32 %v658, %v676
      %v684 = vadd.f32 %v659, %v677
      %v685 = vadd.f32 %v660, %v678
      %v686 = vadd.f32 %v661, %v679
      %v687 = vadd.f32 %v662, %v680
      %s688 = sadd.s32 %s14, 4
      %s689 = smul.u32 %s688, 16
      %s690 = scalar_lea.vmem %s0, %s689
      %v691 = vld [vmem:[%s690] sm:$0x7f]
      %v692 = vld [vmem:[%s690 + $0x10] sm:$0x7f]
      %v693 = vld [vmem:[%s690 + $0x20] sm:$0x7f]
      %v694 = vld [vmem:[%s690 + $0x30] sm:$0x7f]
      %v695 = vld [vmem:[%s690 + $0x40] sm:$0x7f]
      %v696 = vld [vmem:[%s690 + $0x50] sm:$0x7f]
      %v697 = vld [vmem:[%s690 + $0x60] sm:$0x7f]
      %v698 = vlaneseq
      %v699 = vshrl.u32 %v698, 7
      %v700 = vsub.s32 0, %v699
      %v701 = vrot.slane %v176, %v700
      %v702 = vmul.f32 %v691, %v701
      %v703 = vmul.f32 %v692, %v701
      %v704 = vmul.f32 %v693, %v701
      %v705 = vmul.f32 %v694, %v701
      %v706 = vmul.f32 %v695, %v701
      %v707 = vmul.f32 %v696, %v701
      %v708 = vmul.f32 %v697, %v701
      %v709 = vadd.f32 %v681, %v702
      %v710 = vadd.f32 %v682, %v703
      %v711 = vadd.f32 %v683, %v704
      %v712 = vadd.f32 %v684, %v705
      %v713 = vadd.f32 %v685, %v706
      %v714 = vadd.f32 %v686, %v707
      %v715 = vadd.f32 %v687, %v708
      %v716 = vld [vmem:[%s690 + $0x1] sm:$0x7f]
      %v717 = vld [vmem:[%s690 + $0x11] sm:$0x7f]
      %v718 = vld [vmem:[%s690 + $0x21] sm:$0x7f]
      %v719 = vld [vmem:[%s690 + $0x31] sm:$0x7f]
      %v720 = vld [vmem:[%s690 + $0x41] sm:$0x7f]
      %v721 = vld [vmem:[%s690 + $0x51] sm:$0x7f]
      %v722 = vld [vmem:[%s690 + $0x61] sm:$0x7f]
      %v723 = vlaneseq
      %v724 = vshrl.u32 %v723, 7
      %v725 = vsub.s32 1, %v724
      %v726 = vrot.slane %v176, %v725
      %v727 = vmul.f32 %v716, %v726
      %v728 = vmul.f32 %v717, %v726
      %v729 = vmul.f32 %v718, %v726
      %v730 = vmul.f32 %v719, %v726
      %v731 = vmul.f32 %v720, %v726
      %v732 = vmul.f32 %v721, %v726
      %v733 = vmul.f32 %v722, %v726
      %v734 = vadd.f32 %v709, %v727
      %v735 = vadd.f32 %v710, %v728
      %v736 = vadd.f32 %v711, %v729
      %v737 = vadd.f32 %v712, %v730
      %v738 = vadd.f32 %v713, %v731
      %v739 = vadd.f32 %v714, %v732
      %v740 = vadd.f32 %v715, %v733
      %v741 = vld [vmem:[%s690 + $0x2] sm:$0x7f]
      %v742 = vld [vmem:[%s690 + $0x12] sm:$0x7f]
      %v743 = vld [vmem:[%s690 + $0x22] sm:$0x7f]
      %v744 = vld [vmem:[%s690 + $0x32] sm:$0x7f]
      %v745 = vld [vmem:[%s690 + $0x42] sm:$0x7f]
      %v746 = vld [vmem:[%s690 + $0x52] sm:$0x7f]
      %v747 = vld [vmem:[%s690 + $0x62] sm:$0x7f]
      %v748 = vlaneseq
      %v749 = vshrl.u32 %v748, 7
      %v750 = vsub.s32 2, %v749
      %v751 = vrot.slane %v176, %v750
      %v752 = vmul.f32 %v741, %v751
      %v753 = vmul.f32 %v742, %v751
      %v754 = vmul.f32 %v743, %v751
      %v755 = vmul.f32 %v744, %v751
      %v756 = vmul.f32 %v745, %v751
      %v757 = vmul.f32 %v746, %v751
      %v758 = vmul.f32 %v747, %v751
      %v759 = vadd.f32 %v734, %v752
      %v760 = vadd.f32 %v735, %v753
      %v761 = vadd.f32 %v736, %v754
      %v762 = vadd.f32 %v737, %v755
      %v763 = vadd.f32 %v738, %v756
      %v764 = vadd.f32 %v739, %v757
      %v765 = vadd.f32 %v740, %v758
      %v766 = vld [vmem:[%s690 + $0x3] sm:$0x7f]
      %v767 = vld [vmem:[%s690 + $0x13] sm:$0x7f]
      %v768 = vld [vmem:[%s690 + $0x23] sm:$0x7f]
      %v769 = vld [vmem:[%s690 + $0x33] sm:$0x7f]
      %v770 = vld [vmem:[%s690 + $0x43] sm:$0x7f]
      %v771 = vld [vmem:[%s690 + $0x53] sm:$0x7f]
      %v772 = vld [vmem:[%s690 + $0x63] sm:$0x7f]
      %v773 = vlaneseq
      %v774 = vshrl.u32 %v773, 7
      %v775 = vsub.s32 3, %v774
      %v776 = vrot.slane %v176, %v775
      %v777 = vmul.f32 %v766, %v776
      %v778 = vmul.f32 %v767, %v776
      %v779 = vmul.f32 %v768, %v776
      %v780 = vmul.f32 %v769, %v776
      %v781 = vmul.f32 %v770, %v776
      %v782 = vmul.f32 %v771, %v776
      %v783 = vmul.f32 %v772, %v776
      %v784 = vadd.f32 %v759, %v777
      %v785 = vadd.f32 %v760, %v778
      %v786 = vadd.f32 %v761, %v779
      %v787 = vadd.f32 %v762, %v780
      %v788 = vadd.f32 %v763, %v781
      %v789 = vadd.f32 %v764, %v782
      %v790 = vadd.f32 %v765, %v783
      %v791 = vld [vmem:[%s690 + $0x4] sm:$0x7f]
      %v792 = vld [vmem:[%s690 + $0x14] sm:$0x7f]
      %v793 = vld [vmem:[%s690 + $0x24] sm:$0x7f]
      %v794 = vld [vmem:[%s690 + $0x34] sm:$0x7f]
      %v795 = vld [vmem:[%s690 + $0x44] sm:$0x7f]
      %v796 = vld [vmem:[%s690 + $0x54] sm:$0x7f]
      %v797 = vld [vmem:[%s690 + $0x64] sm:$0x7f]
      %v798 = vlaneseq
      %v799 = vshrl.u32 %v798, 7
      %v800 = vsub.s32 4, %v799
      %v801 = vrot.slane %v176, %v800
      %v802 = vmul.f32 %v791, %v801
      %v803 = vmul.f32 %v792, %v801
      %v804 = vmul.f32 %v793, %v801
      %v805 = vmul.f32 %v794, %v801
      %v806 = vmul.f32 %v795, %v801
      %v807 = vmul.f32 %v796, %v801
      %v808 = vmul.f32 %v797, %v801
      %v809 = vadd.f32 %v784, %v802
      %v810 = vadd.f32 %v785, %v803
      %v811 = vadd.f32 %v786, %v804
      %v812 = vadd.f32 %v787, %v805
      %v813 = vadd.f32 %v788, %v806
      %v814 = vadd.f32 %v789, %v807
      %v815 = vadd.f32 %v790, %v808
      %v817 = vlaneseq
      %v818 = vshrl.u32 %v817, 7
      %v819 = vsub.s32 0, %v818
      %v820 = vrot.slane %v171, %v819
      %v822 = vadd.f32 %v809, %v820
      %v823 = vadd.f32 %v810, %v820
      %v824 = vadd.f32 %v811, %v820
      %v825 = vadd.f32 %v812, %v820
      %v826 = vadd.f32 %v813, %v820
      %v827 = vadd.f32 %v814, %v820
      %v828 = vadd.f32 %v815, %v820
      %v829 = vadd.f32 %v822, 3.0
      %v830 = vadd.f32 %v823, 3.0
      %v831 = vadd.f32 %v824, 3.0
      %v832 = vadd.f32 %v825, 3.0
      %v833 = vadd.f32 %v826, 3.0
      %v834 = vadd.f32 %v827, 3.0
      %v835 = vadd.f32 %v828, 3.0
      %v836 = vmax.f32 %v829, 0.0
      %v837 = vmax.f32 %v830, 0.0
      %v838 = vmax.f32 %v831, 0.0
      %v839 = vmax.f32 %v832, 0.0
      %v840 = vmax.f32 %v833, 0.0
      %v841 = vmax.f32 %v834, 0.0
      %v842 = vmax.f32 %v835, 0.0
      %v843 = vmin.f32 %v836, 6.0
      %v844 = vmin.f32 %v837, 6.0
      %v845 = vmin.f32 %v838, 6.0
      %v846 = vmin.f32 %v839, 6.0
      %v847 = vmin.f32 %v840, 6.0
      %v848 = vmin.f32 %v841, 6.0
      %v849 = vmin.f32 %v842, 6.0
      %v850 = vmul.f32 %v843, 0.16666667
      %v851 = vmul.f32 %v844, 0.16666667
      %v852 = vmul.f32 %v845, 0.16666667
      %v853 = vmul.f32 %v846, 0.16666667
      %v854 = vmul.f32 %v847, 0.16666667
      %v855 = vmul.f32 %v848, 0.16666667
      %v856 = vmul.f32 %v849, 0.16666667
      %vm857 = vcmask 522240
      %858 = vst.msk [vmem:[%s170] sm:$0x7f] %vm857, %v850
      %859 = vst.msk [vmem:[%s170 + $0x8] sm:$0x7f] %vm857, %v851
      %860 = vst.msk [vmem:[%s170 + $0x10] sm:$0x7f] %vm857, %v852
      %861 = vst.msk [vmem:[%s170 + $0x18] sm:$0x7f] %vm857, %v853
      %862 = vst.msk [vmem:[%s170 + $0x20] sm:$0x7f] %vm857, %v854
      %863 = vst.msk [vmem:[%s170 + $0x28] sm:$0x7f] %vm857, %v855
      %864 = vst.msk [vmem:[%s170 + $0x30] sm:$0x7f] %vm857, %v856
      %s865 = scalar_lea.vmem %s165, 40
      %v866 = vld [vmem:[%s865] sm:$0x1f]
      %v867 = vld [vmem:[%s865 + $0x8] sm:$0x1f]
      %v868 = vld [vmem:[%s865 + $0x10] sm:$0x1f]
      %v869 = vld [vmem:[%s865 + $0x18] sm:$0x1f]
      %v870 = vld [vmem:[%s865 + $0x20] sm:$0x1f]
      %v871 = vld [vmem:[%s178 + $0x1] sm:$0x7f]
      %v872 = vld [vmem:[%s178 + $0x11] sm:$0x7f]
      %v873 = vld [vmem:[%s178 + $0x21] sm:$0x7f]
      %v874 = vld [vmem:[%s178 + $0x31] sm:$0x7f]
      %v875 = vld [vmem:[%s178 + $0x41] sm:$0x7f]
      %v876 = vld [vmem:[%s178 + $0x51] sm:$0x7f]
      %v877 = vld [vmem:[%s178 + $0x61] sm:$0x7f]
      %v878 = vlaneseq
      %v879 = vshrl.u32 %v878, 7
      %v880 = vsub.s32 0, %v879
      %v881 = vrot.slane %v866, %v880
      %v882 = vmul.f32 %v871, %v881
      %v883 = vmul.f32 %v872, %v881
      %v884 = vmul.f32 %v873, %v881
      %v885 = vmul.f32 %v874, %v881
      %v886 = vmul.f32 %v875, %v881
      %v887 = vmul.f32 %v876, %v881
      %v888 = vmul.f32 %v877, %v881
      %v889 = vadd.f32 %v882, 0.0
      %v890 = vadd.f32 %v883, 0.0
      %v891 = vadd.f32 %v884, 0.0
      %v892 = vadd.f32 %v885, 0.0
      %v893 = vadd.f32 %v886, 0.0
      %v894 = vadd.f32 %v887, 0.0
      %v895 = vadd.f32 %v888, 0.0
      %v896 = vld [vmem:[%s178 + $0x2] sm:$0x7f]
      %v897 = vld [vmem:[%s178 + $0x12] sm:$0x7f]
      %v898 = vld [vmem:[%s178 + $0x22] sm:$0x7f]
      %v899 = vld [vmem:[%s178 + $0x32] sm:$0x7f]
      %v900 = vld [vmem:[%s178 + $0x42] sm:$0x7f]
      %v901 = vld [vmem:[%s178 + $0x52] sm:$0x7f]
      %v902 = vld [vmem:[%s178 + $0x62] sm:$0x7f]
      %v903 = vlaneseq
      %v904 = vshrl.u32 %v903, 7
      %v905 = vsub.s32 1, %v904
      %v906 = vrot.slane %v866, %v905
      %v907 = vmul.f32 %v896, %v906
      %v908 = vmul.f32 %v897, %v906
      %v909 = vmul.f32 %v898, %v906
      %v910 = vmul.f32 %v899, %v906
      %v911 = vmul.f32 %v900, %v906
      %v912 = vmul.f32 %v901, %v906
      %v913 = vmul.f32 %v902, %v906
      %v914 = vadd.f32 %v889, %v907
      %v915 = vadd.f32 %v890, %v908
      %v916 = vadd.f32 %v891, %v909
      %v917 = vadd.f32 %v892, %v910
      %v918 = vadd.f32 %v893, %v911
      %v919 = vadd.f32 %v894, %v912
      %v920 = vadd.f32 %v895, %v913
      %v921 = vld [vmem:[%s178 + $0x3] sm:$0x7f]
      %v922 = vld [vmem:[%s178 + $0x13] sm:$0x7f]
      %v923 = vld [vmem:[%s178 + $0x23] sm:$0x7f]
      %v924 = vld [vmem:[%s178 + $0x33] sm:$0x7f]
      %v925 = vld [vmem:[%s178 + $0x43] sm:$0x7f]
      %v926 = vld [vmem:[%s178 + $0x53] sm:$0x7f]
      %v927 = vld [vmem:[%s178 + $0x63] sm:$0x7f]
      %v928 = vlaneseq
      %v929 = vshrl.u32 %v928, 7
      %v930 = vsub.s32 2, %v929
      %v931 = vrot.slane %v866, %v930
      %v932 = vmul.f32 %v921, %v931
      %v933 = vmul.f32 %v922, %v931
      %v934 = vmul.f32 %v923, %v931
      %v935 = vmul.f32 %v924, %v931
      %v936 = vmul.f32 %v925, %v931
      %v937 = vmul.f32 %v926, %v931
      %v938 = vmul.f32 %v927, %v931
      %v939 = vadd.f32 %v914, %v932
      %v940 = vadd.f32 %v915, %v933
      %v941 = vadd.f32 %v916, %v934
      %v942 = vadd.f32 %v917, %v935
      %v943 = vadd.f32 %v918, %v936
      %v944 = vadd.f32 %v919, %v937
      %v945 = vadd.f32 %v920, %v938
      %v946 = vld [vmem:[%s178 + $0x4] sm:$0x7f]
      %v947 = vld [vmem:[%s178 + $0x14] sm:$0x7f]
      %v948 = vld [vmem:[%s178 + $0x24] sm:$0x7f]
      %v949 = vld [vmem:[%s178 + $0x34] sm:$0x7f]
      %v950 = vld [vmem:[%s178 + $0x44] sm:$0x7f]
      %v951 = vld [vmem:[%s178 + $0x54] sm:$0x7f]
      %v952 = vld [vmem:[%s178 + $0x64] sm:$0x7f]
      %v953 = vlaneseq
      %v954 = vshrl.u32 %v953, 7
      %v955 = vsub.s32 3, %v954
      %v956 = vrot.slane %v866, %v955
      %v957 = vmul.f32 %v946, %v956
      %v958 = vmul.f32 %v947, %v956
      %v959 = vmul.f32 %v948, %v956
      %v960 = vmul.f32 %v949, %v956
      %v961 = vmul.f32 %v950, %v956
      %v962 = vmul.f32 %v951, %v956
      %v963 = vmul.f32 %v952, %v956
      %v964 = vadd.f32 %v939, %v957
      %v965 = vadd.f32 %v940, %v958
      %v966 = vadd.f32 %v941, %v959
      %v967 = vadd.f32 %v942, %v960
      %v968 = vadd.f32 %v943, %v961
      %v969 = vadd.f32 %v944, %v962
      %v970 = vadd.f32 %v945, %v963
      %v971 = vld [vmem:[%s178 + $0x5] sm:$0x7f]
      %v972 = vld [vmem:[%s178 + $0x15] sm:$0x7f]
      %v973 = vld [vmem:[%s178 + $0x25] sm:$0x7f]
      %v974 = vld [vmem:[%s178 + $0x35] sm:$0x7f]
      %v975 = vld [vmem:[%s178 + $0x45] sm:$0x7f]
      %v976 = vld [vmem:[%s178 + $0x55] sm:$0x7f]
      %v977 = vld [vmem:[%s178 + $0x65] sm:$0x7f]
      %v978 = vlaneseq
      %v979 = vshrl.u32 %v978, 7
      %v980 = vsub.s32 4, %v979
      %v981 = vrot.slane %v866, %v980
      %v982 = vmul.f32 %v971, %v981
      %v983 = vmul.f32 %v972, %v981
      %v984 = vmul.f32 %v973, %v981
      %v985 = vmul.f32 %v974, %v981
      %v986 = vmul.f32 %v975, %v981
      %v987 = vmul.f32 %v976, %v981
      %v988 = vmul.f32 %v977, %v981
      %v989 = vadd.f32 %v964, %v982
      %v990 = vadd.f32 %v965, %v983
      %v991 = vadd.f32 %v966, %v984
      %v992 = vadd.f32 %v967, %v985
      %v993 = vadd.f32 %v968, %v986
      %v994 = vadd.f32 %v969, %v987
      %v995 = vadd.f32 %v970, %v988
      %v996 = vld [vmem:[%s306 + $0x1] sm:$0x7f]
      %v997 = vld [vmem:[%s306 + $0x11] sm:$0x7f]
      %v998 = vld [vmem:[%s306 + $0x21] sm:$0x7f]
      %v999 = vld [vmem:[%s306 + $0x31] sm:$0x7f]
      %v1000 = vld [vmem:[%s306 + $0x41] sm:$0x7f]
      %v1001 = vld [vmem:[%s306 + $0x51] sm:$0x7f]
      %v1002 = vld [vmem:[%s306 + $0x61] sm:$0x7f]
      %v1003 = vlaneseq
      %v1004 = vshrl.u32 %v1003, 7
      %v1005 = vsub.s32 0, %v1004
      %v1006 = vrot.slane %v867, %v1005
      %v1007 = vmul.f32 %v996, %v1006
      %v1008 = vmul.f32 %v997, %v1006
      %v1009 = vmul.f32 %v998, %v1006
      %v1010 = vmul.f32 %v999, %v1006
      %v1011 = vmul.f32 %v1000, %v1006
      %v1012 = vmul.f32 %v1001, %v1006
      %v1013 = vmul.f32 %v1002, %v1006
      %v1014 = vadd.f32 %v989, %v1007
      %v1015 = vadd.f32 %v990, %v1008
      %v1016 = vadd.f32 %v991, %v1009
      %v1017 = vadd.f32 %v992, %v1010
      %v1018 = vadd.f32 %v993, %v1011
      %v1019 = vadd.f32 %v994, %v1012
      %v1020 = vadd.f32 %v995, %v1013
      %v1021 = vld [vmem:[%s306 + $0x2] sm:$0x7f]
      %v1022 = vld [vmem:[%s306 + $0x12] sm:$0x7f]
      %v1023 = vld [vmem:[%s306 + $0x22] sm:$0x7f]
      %v1024 = vld [vmem:[%s306 + $0x32] sm:$0x7f]
      %v1025 = vld [vmem:[%s306 + $0x42] sm:$0x7f]
      %v1026 = vld [vmem:[%s306 + $0x52] sm:$0x7f]
      %v1027 = vld [vmem:[%s306 + $0x62] sm:$0x7f]
      %v1028 = vlaneseq
      %v1029 = vshrl.u32 %v1028, 7
      %v1030 = vsub.s32 1, %v1029
      %v1031 = vrot.slane %v867, %v1030
      %v1032 = vmul.f32 %v1021, %v1031
      %v1033 = vmul.f32 %v1022, %v1031
      %v1034 = vmul.f32 %v1023, %v1031
      %v1035 = vmul.f32 %v1024, %v1031
      %v1036 = vmul.f32 %v1025, %v1031
      %v1037 = vmul.f32 %v1026, %v1031
      %v1038 = vmul.f32 %v1027, %v1031
      %v1039 = vadd.f32 %v1014, %v1032
      %v1040 = vadd.f32 %v1015, %v1033
      %v1041 = vadd.f32 %v1016, %v1034
      %v1042 = vadd.f32 %v1017, %v1035
      %v1043 = vadd.f32 %v1018, %v1036
      %v1044 = vadd.f32 %v1019, %v1037
      %v1045 = vadd.f32 %v1020, %v1038
      %v1046 = vld [vmem:[%s306 + $0x3] sm:$0x7f]
      %v1047 = vld [vmem:[%s306 + $0x13] sm:$0x7f]
      %v1048 = vld [vmem:[%s306 + $0x23] sm:$0x7f]
      %v1049 = vld [vmem:[%s306 + $0x33] sm:$0x7f]
      %v1050 = vld [vmem:[%s306 + $0x43] sm:$0x7f]
      %v1051 = vld [vmem:[%s306 + $0x53] sm:$0x7f]
      %v1052 = vld [vmem:[%s306 + $0x63] sm:$0x7f]
      %v1053 = vlaneseq
      %v1054 = vshrl.u32 %v1053, 7
      %v1055 = vsub.s32 2, %v1054
      %v1056 = vrot.slane %v867, %v1055
      %v1057 = vmul.f32 %v1046, %v1056
      %v1058 = vmul.f32 %v1047, %v1056
      %v1059 = vmul.f32 %v1048, %v1056
      %v1060 = vmul.f32 %v1049, %v1056
      %v1061 = vmul.f32 %v1050, %v1056
      %v1062 = vmul.f32 %v1051, %v1056
      %v1063 = vmul.f32 %v1052, %v1056
      %v1064 = vadd.f32 %v1039, %v1057
      %v1065 = vadd.f32 %v1040, %v1058
      %v1066 = vadd.f32 %v1041, %v1059
      %v1067 = vadd.f32 %v1042, %v1060
      %v1068 = vadd.f32 %v1043, %v1061
      %v1069 = vadd.f32 %v1044, %v1062
      %v1070 = vadd.f32 %v1045, %v1063
      %v1071 = vld [vmem:[%s306 + $0x4] sm:$0x7f]
      %v1072 = vld [vmem:[%s306 + $0x14] sm:$0x7f]
      %v1073 = vld [vmem:[%s306 + $0x24] sm:$0x7f]
      %v1074 = vld [vmem:[%s306 + $0x34] sm:$0x7f]
      %v1075 = vld [vmem:[%s306 + $0x44] sm:$0x7f]
      %v1076 = vld [vmem:[%s306 + $0x54] sm:$0x7f]
      %v1077 = vld [vmem:[%s306 + $0x64] sm:$0x7f]
      %v1078 = vlaneseq
      %v1079 = vshrl.u32 %v1078, 7
      %v1080 = vsub.s32 3, %v1079
      %v1081 = vrot.slane %v867, %v1080
      %v1082 = vmul.f32 %v1071, %v1081
      %v1083 = vmul.f32 %v1072, %v1081
      %v1084 = vmul.f32 %v1073, %v1081
      %v1085 = vmul.f32 %v1074, %v1081
      %v1086 = vmul.f32 %v1075, %v1081
      %v1087 = vmul.f32 %v1076, %v1081
      %v1088 = vmul.f32 %v1077, %v1081
      %v1089 = vadd.f32 %v1064, %v1082
      %v1090 = vadd.f32 %v1065, %v1083
      %v1091 = vadd.f32 %v1066, %v1084
      %v1092 = vadd.f32 %v1067, %v1085
      %v1093 = vadd.f32 %v1068, %v1086
      %v1094 = vadd.f32 %v1069, %v1087
      %v1095 = vadd.f32 %v1070, %v1088
      %v1096 = vld [vmem:[%s306 + $0x5] sm:$0x7f]
      %v1097 = vld [vmem:[%s306 + $0x15] sm:$0x7f]
      %v1098 = vld [vmem:[%s306 + $0x25] sm:$0x7f]
      %v1099 = vld [vmem:[%s306 + $0x35] sm:$0x7f]
      %v1100 = vld [vmem:[%s306 + $0x45] sm:$0x7f]
      %v1101 = vld [vmem:[%s306 + $0x55] sm:$0x7f]
      %v1102 = vld [vmem:[%s306 + $0x65] sm:$0x7f]
      %v1103 = vlaneseq
      %v1104 = vshrl.u32 %v1103, 7
      %v1105 = vsub.s32 4, %v1104
      %v1106 = vrot.slane %v867, %v1105
      %v1107 = vmul.f32 %v1096, %v1106
      %v1108 = vmul.f32 %v1097, %v1106
      %v1109 = vmul.f32 %v1098, %v1106
      %v1110 = vmul.f32 %v1099, %v1106
      %v1111 = vmul.f32 %v1100, %v1106
      %v1112 = vmul.f32 %v1101, %v1106
      %v1113 = vmul.f32 %v1102, %v1106
      %v1114 = vadd.f32 %v1089, %v1107
      %v1115 = vadd.f32 %v1090, %v1108
      %v1116 = vadd.f32 %v1091, %v1109
      %v1117 = vadd.f32 %v1092, %v1110
      %v1118 = vadd.f32 %v1093, %v1111
      %v1119 = vadd.f32 %v1094, %v1112
      %v1120 = vadd.f32 %v1095, %v1113
      %v1121 = vld [vmem:[%s434 + $0x1] sm:$0x7f]
      %v1122 = vld [vmem:[%s434 + $0x11] sm:$0x7f]
      %v1123 = vld [vmem:[%s434 + $0x21] sm:$0x7f]
      %v1124 = vld [vmem:[%s434 + $0x31] sm:$0x7f]
      %v1125 = vld [vmem:[%s434 + $0x41] sm:$0x7f]
      %v1126 = vld [vmem:[%s434 + $0x51] sm:$0x7f]
      %v1127 = vld [vmem:[%s434 + $0x61] sm:$0x7f]
      %v1128 = vlaneseq
      %v1129 = vshrl.u32 %v1128, 7
      %v1130 = vsub.s32 0, %v1129
      %v1131 = vrot.slane %v868, %v1130
      %v1132 = vmul.f32 %v1121, %v1131
      %v1133 = vmul.f32 %v1122, %v1131
      %v1134 = vmul.f32 %v1123, %v1131
      %v1135 = vmul.f32 %v1124, %v1131
      %v1136 = vmul.f32 %v1125, %v1131
      %v1137 = vmul.f32 %v1126, %v1131
      %v1138 = vmul.f32 %v1127, %v1131
      %v1139 = vadd.f32 %v1114, %v1132
      %v1140 = vadd.f32 %v1115, %v1133
      %v1141 = vadd.f32 %v1116, %v1134
      %v1142 = vadd.f32 %v1117, %v1135
      %v1143 = vadd.f32 %v1118, %v1136
      %v1144 = vadd.f32 %v1119, %v1137
      %v1145 = vadd.f32 %v1120, %v1138
      %v1146 = vld [vmem:[%s434 + $0x2] sm:$0x7f]
      %v1147 = vld [vmem:[%s434 + $0x12] sm:$0x7f]
      %v1148 = vld [vmem:[%s434 + $0x22] sm:$0x7f]
      %v1149 = vld [vmem:[%s434 + $0x32] sm:$0x7f]
      %v1150 = vld [vmem:[%s434 + $0x42] sm:$0x7f]
      %v1151 = vld [vmem:[%s434 + $0x52] sm:$0x7f]
      %v1152 = vld [vmem:[%s434 + $0x62] sm:$0x7f]
      %v1153 = vlaneseq
      %v1154 = vshrl.u32 %v1153, 7
      %v1155 = vsub.s32 1, %v1154
      %v1156 = vrot.slane %v868, %v1155
      %v1157 = vmul.f32 %v1146, %v1156
      %v1158 = vmul.f32 %v1147, %v1156
      %v1159 = vmul.f32 %v1148, %v1156
      %v1160 = vmul.f32 %v1149, %v1156
      %v1161 = vmul.f32 %v1150, %v1156
      %v1162 = vmul.f32 %v1151, %v1156
      %v1163 = vmul.f32 %v1152, %v1156
      %v1164 = vadd.f32 %v1139, %v1157
      %v1165 = vadd.f32 %v1140, %v1158
      %v1166 = vadd.f32 %v1141, %v1159
      %v1167 = vadd.f32 %v1142, %v1160
      %v1168 = vadd.f32 %v1143, %v1161
      %v1169 = vadd.f32 %v1144, %v1162
      %v1170 = vadd.f32 %v1145, %v1163
      %v1171 = vld [vmem:[%s434 + $0x3] sm:$0x7f]
      %v1172 = vld [vmem:[%s434 + $0x13] sm:$0x7f]
      %v1173 = vld [vmem:[%s434 + $0x23] sm:$0x7f]
      %v1174 = vld [vmem:[%s434 + $0x33] sm:$0x7f]
      %v1175 = vld [vmem:[%s434 + $0x43] sm:$0x7f]
      %v1176 = vld [vmem:[%s434 + $0x53] sm:$0x7f]
      %v1177 = vld [vmem:[%s434 + $0x63] sm:$0x7f]
      %v1178 = vlaneseq
      %v1179 = vshrl.u32 %v1178, 7
      %v1180 = vsub.s32 2, %v1179
      %v1181 = vrot.slane %v868, %v1180
      %v1182 = vmul.f32 %v1171, %v1181
      %v1183 = vmul.f32 %v1172, %v1181
      %v1184 = vmul.f32 %v1173, %v1181
      %v1185 = vmul.f32 %v1174, %v1181
      %v1186 = vmul.f32 %v1175, %v1181
      %v1187 = vmul.f32 %v1176, %v1181
      %v1188 = vmul.f32 %v1177, %v1181
      %v1189 = vadd.f32 %v1164, %v1182
      %v1190 = vadd.f32 %v1165, %v1183
      %v1191 = vadd.f32 %v1166, %v1184
      %v1192 = vadd.f32 %v1167, %v1185
      %v1193 = vadd.f32 %v1168, %v1186
      %v1194 = vadd.f32 %v1169, %v1187
      %v1195 = vadd.f32 %v1170, %v1188
      %v1196 = vld [vmem:[%s434 + $0x4] sm:$0x7f]
      %v1197 = vld [vmem:[%s434 + $0x14] sm:$0x7f]
      %v1198 = vld [vmem:[%s434 + $0x24] sm:$0x7f]
      %v1199 = vld [vmem:[%s434 + $0x34] sm:$0x7f]
      %v1200 = vld [vmem:[%s434 + $0x44] sm:$0x7f]
      %v1201 = vld [vmem:[%s434 + $0x54] sm:$0x7f]
      %v1202 = vld [vmem:[%s434 + $0x64] sm:$0x7f]
      %v1203 = vlaneseq
      %v1204 = vshrl.u32 %v1203, 7
      %v1205 = vsub.s32 3, %v1204
      %v1206 = vrot.slane %v868, %v1205
      %v1207 = vmul.f32 %v1196, %v1206
      %v1208 = vmul.f32 %v1197, %v1206
      %v1209 = vmul.f32 %v1198, %v1206
      %v1210 = vmul.f32 %v1199, %v1206
      %v1211 = vmul.f32 %v1200, %v1206
      %v1212 = vmul.f32 %v1201, %v1206
      %v1213 = vmul.f32 %v1202, %v1206
      %v1214 = vadd.f32 %v1189, %v1207
      %v1215 = vadd.f32 %v1190, %v1208
      %v1216 = vadd.f32 %v1191, %v1209
      %v1217 = vadd.f32 %v1192, %v1210
      %v1218 = vadd.f32 %v1193, %v1211
      %v1219 = vadd.f32 %v1194, %v1212
      %v1220 = vadd.f32 %v1195, %v1213
      %v1221 = vld [vmem:[%s434 + $0x5] sm:$0x7f]
      %v1222 = vld [vmem:[%s434 + $0x15] sm:$0x7f]
      %v1223 = vld [vmem:[%s434 + $0x25] sm:$0x7f]
      %v1224 = vld [vmem:[%s434 + $0x35] sm:$0x7f]
      %v1225 = vld [vmem:[%s434 + $0x45] sm:$0x7f]
      %v1226 = vld [vmem:[%s434 + $0x55] sm:$0x7f]
      %v1227 = vld [vmem:[%s434 + $0x65] sm:$0x7f]
      %v1228 = vlaneseq
      %v1229 = vshrl.u32 %v1228, 7
      %v1230 = vsub.s32 4, %v1229
      %v1231 = vrot.slane %v868, %v1230
      %v1232 = vmul.f32 %v1221, %v1231
      %v1233 = vmul.f32 %v1222, %v1231
      %v1234 = vmul.f32 %v1223, %v1231
      %v1235 = vmul.f32 %v1224, %v1231
      %v1236 = vmul.f32 %v1225, %v1231
      %v1237 = vmul.f32 %v1226, %v1231
      %v1238 = vmul.f32 %v1227, %v1231
      %v1239 = vadd.f32 %v1214, %v1232
      %v1240 = vadd.f32 %v1215, %v1233
      %v1241 = vadd.f32 %v1216, %v1234
      %v1242 = vadd.f32 %v1217, %v1235
      %v1243 = vadd.f32 %v1218, %v1236
      %v1244 = vadd.f32 %v1219, %v1237
      %v1245 = vadd.f32 %v1220, %v1238
      %v1246 = vld [vmem:[%s562 + $0x1] sm:$0x7f]
      %v1247 = vld [vmem:[%s562 + $0x11] sm:$0x7f]
      %v1248 = vld [vmem:[%s562 + $0x21] sm:$0x7f]
      %v1249 = vld [vmem:[%s562 + $0x31] sm:$0x7f]
      %v1250 = vld [vmem:[%s562 + $0x41] sm:$0x7f]
      %v1251 = vld [vmem:[%s562 + $0x51] sm:$0x7f]
      %v1252 = vld [vmem:[%s562 + $0x61] sm:$0x7f]
      %v1253 = vlaneseq
      %v1254 = vshrl.u32 %v1253, 7
      %v1255 = vsub.s32 0, %v1254
      %v1256 = vrot.slane %v869, %v1255
      %v1257 = vmul.f32 %v1246, %v1256
      %v1258 = vmul.f32 %v1247, %v1256
      %v1259 = vmul.f32 %v1248, %v1256
      %v1260 = vmul.f32 %v1249, %v1256
      %v1261 = vmul.f32 %v1250, %v1256
      %v1262 = vmul.f32 %v1251, %v1256
      %v1263 = vmul.f32 %v1252, %v1256
      %v1264 = vadd.f32 %v1239, %v1257
      %v1265 = vadd.f32 %v1240, %v1258
      %v1266 = vadd.f32 %v1241, %v1259
      %v1267 = vadd.f32 %v1242, %v1260
      %v1268 = vadd.f32 %v1243, %v1261
      %v1269 = vadd.f32 %v1244, %v1262
      %v1270 = vadd.f32 %v1245, %v1263
      %v1271 = vld [vmem:[%s562 + $0x2] sm:$0x7f]
      %v1272 = vld [vmem:[%s562 + $0x12] sm:$0x7f]
      %v1273 = vld [vmem:[%s562 + $0x22] sm:$0x7f]
      %v1274 = vld [vmem:[%s562 + $0x32] sm:$0x7f]
      %v1275 = vld [vmem:[%s562 + $0x42] sm:$0x7f]
      %v1276 = vld [vmem:[%s562 + $0x52] sm:$0x7f]
      %v1277 = vld [vmem:[%s562 + $0x62] sm:$0x7f]
      %v1278 = vlaneseq
      %v1279 = vshrl.u32 %v1278, 7
      %v1280 = vsub.s32 1, %v1279
      %v1281 = vrot.slane %v869, %v1280
      %v1282 = vmul.f32 %v1271, %v1281
      %v1283 = vmul.f32 %v1272, %v1281
      %v1284 = vmul.f32 %v1273, %v1281
      %v1285 = vmul.f32 %v1274, %v1281
      %v1286 = vmul.f32 %v1275, %v1281
      %v1287 = vmul.f32 %v1276, %v1281
      %v1288 = vmul.f32 %v1277, %v1281
      %v1289 = vadd.f32 %v1264, %v1282
      %v1290 = vadd.f32 %v1265, %v1283
      %v1291 = vadd.f32 %v1266, %v1284
      %v1292 = vadd.f32 %v1267, %v1285
      %v1293 = vadd.f32 %v1268, %v1286
      %v1294 = vadd.f32 %v1269, %v1287
      %v1295 = vadd.f32 %v1270, %v1288
      %v1296 = vld [vmem:[%s562 + $0x3] sm:$0x7f]
      %v1297 = vld [vmem:[%s562 + $0x13] sm:$0x7f]
      %v1298 = vld [vmem:[%s562 + $0x23] sm:$0x7f]
      %v1299 = vld [vmem:[%s562 + $0x33] sm:$0x7f]
      %v1300 = vld [vmem:[%s562 + $0x43] sm:$0x7f]
      %v1301 = vld [vmem:[%s562 + $0x53] sm:$0x7f]
      %v1302 = vld [vmem:[%s562 + $0x63] sm:$0x7f]
      %v1303 = vlaneseq
      %v1304 = vshrl.u32 %v1303, 7
      %v1305 = vsub.s32 2, %v1304
      %v1306 = vrot.slane %v869, %v1305
      %v1307 = vmul.f32 %v1296, %v1306
      %v1308 = vmul.f32 %v1297, %v1306
      %v1309 = vmul.f32 %v1298, %v1306
      %v1310 = vmul.f32 %v1299, %v1306
      %v1311 = vmul.f32 %v1300, %v1306
      %v1312 = vmul.f32 %v1301, %v1306
      %v1313 = vmul.f32 %v1302, %v1306
      %v1314 = vadd.f32 %v1289, %v1307
      %v1315 = vadd.f32 %v1290, %v1308
      %v1316 = vadd.f32 %v1291, %v1309
      %v1317 = vadd.f32 %v1292, %v1310
      %v1318 = vadd.f32 %v1293, %v1311
      %v1319 = vadd.f32 %v1294, %v1312
      %v1320 = vadd.f32 %v1295, %v1313
      %v1321 = vld [vmem:[%s562 + $0x4] sm:$0x7f]
      %v1322 = vld [vmem:[%s562 + $0x14] sm:$0x7f]
      %v1323 = vld [vmem:[%s562 + $0x24] sm:$0x7f]
      %v1324 = vld [vmem:[%s562 + $0x34] sm:$0x7f]
      %v1325 = vld [vmem:[%s562 + $0x44] sm:$0x7f]
      %v1326 = vld [vmem:[%s562 + $0x54] sm:$0x7f]
      %v1327 = vld [vmem:[%s562 + $0x64] sm:$0x7f]
      %v1328 = vlaneseq
      %v1329 = vshrl.u32 %v1328, 7
      %v1330 = vsub.s32 3, %v1329
      %v1331 = vrot.slane %v869, %v1330
      %v1332 = vmul.f32 %v1321, %v1331
      %v1333 = vmul.f32 %v1322, %v1331
      %v1334 = vmul.f32 %v1323, %v1331
      %v1335 = vmul.f32 %v1324, %v1331
      %v1336 = vmul.f32 %v1325, %v1331
      %v1337 = vmul.f32 %v1326, %v1331
      %v1338 = vmul.f32 %v1327, %v1331
      %v1339 = vadd.f32 %v1314, %v1332
      %v1340 = vadd.f32 %v1315, %v1333
      %v1341 = vadd.f32 %v1316, %v1334
      %v1342 = vadd.f32 %v1317, %v1335
      %v1343 = vadd.f32 %v1318, %v1336
      %v1344 = vadd.f32 %v1319, %v1337
      %v1345 = vadd.f32 %v1320, %v1338
      %v1346 = vld [vmem:[%s562 + $0x5] sm:$0x7f]
      %v1347 = vld [vmem:[%s562 + $0x15] sm:$0x7f]
      %v1348 = vld [vmem:[%s562 + $0x25] sm:$0x7f]
      %v1349 = vld [vmem:[%s562 + $0x35] sm:$0x7f]
      %v1350 = vld [vmem:[%s562 + $0x45] sm:$0x7f]
      %v1351 = vld [vmem:[%s562 + $0x55] sm:$0x7f]
      %v1352 = vld [vmem:[%s562 + $0x65] sm:$0x7f]
      %v1353 = vlaneseq
      %v1354 = vshrl.u32 %v1353, 7
      %v1355 = vsub.s32 4, %v1354
      %v1356 = vrot.slane %v869, %v1355
      %v1357 = vmul.f32 %v1346, %v1356
      %v1358 = vmul.f32 %v1347, %v1356
      %v1359 = vmul.f32 %v1348, %v1356
      %v1360 = vmul.f32 %v1349, %v1356
      %v1361 = vmul.f32 %v1350, %v1356
      %v1362 = vmul.f32 %v1351, %v1356
      %v1363 = vmul.f32 %v1352, %v1356
      %v1364 = vadd.f32 %v1339, %v1357
      %v1365 = vadd.f32 %v1340, %v1358
      %v1366 = vadd.f32 %v1341, %v1359
      %v1367 = vadd.f32 %v1342, %v1360
      %v1368 = vadd.f32 %v1343, %v1361
      %v1369 = vadd.f32 %v1344, %v1362
      %v1370 = vadd.f32 %v1345, %v1363
      %v1371 = vld [vmem:[%s690 + $0x1] sm:$0x7f]
      %v1372 = vld [vmem:[%s690 + $0x11] sm:$0x7f]
      %v1373 = vld [vmem:[%s690 + $0x21] sm:$0x7f]
      %v1374 = vld [vmem:[%s690 + $0x31] sm:$0x7f]
      %v1375 = vld [vmem:[%s690 + $0x41] sm:$0x7f]
      %v1376 = vld [vmem:[%s690 + $0x51] sm:$0x7f]
      %v1377 = vld [vmem:[%s690 + $0x61] sm:$0x7f]
      %v1378 = vlaneseq
      %v1379 = vshrl.u32 %v1378, 7
      %v1380 = vsub.s32 0, %v1379
      %v1381 = vrot.slane %v870, %v1380
      %v1382 = vmul.f32 %v1371, %v1381
      %v1383 = vmul.f32 %v1372, %v1381
      %v1384 = vmul.f32 %v1373, %v1381
      %v1385 = vmul.f32 %v1374, %v1381
      %v1386 = vmul.f32 %v1375, %v1381
      %v1387 = vmul.f32 %v1376, %v1381
      %v1388 = vmul.f32 %v1377, %v1381
      %v1389 = vadd.f32 %v1364, %v1382
      %v1390 = vadd.f32 %v1365, %v1383
      %v1391 = vadd.f32 %v1366, %v1384
      %v1392 = vadd.f32 %v1367, %v1385
      %v1393 = vadd.f32 %v1368, %v1386
      %v1394 = vadd.f32 %v1369, %v1387
      %v1395 = vadd.f32 %v1370, %v1388
      %v1396 = vld [vmem:[%s690 + $0x2] sm:$0x7f]
      %v1397 = vld [vmem:[%s690 + $0x12] sm:$0x7f]
      %v1398 = vld [vmem:[%s690 + $0x22] sm:$0x7f]
      %v1399 = vld [vmem:[%s690 + $0x32] sm:$0x7f]
      %v1400 = vld [vmem:[%s690 + $0x42] sm:$0x7f]
      %v1401 = vld [vmem:[%s690 + $0x52] sm:$0x7f]
      %v1402 = vld [vmem:[%s690 + $0x62] sm:$0x7f]
      %v1403 = vlaneseq
      %v1404 = vshrl.u32 %v1403, 7
      %v1405 = vsub.s32 1, %v1404
      %v1406 = vrot.slane %v870, %v1405
      %v1407 = vmul.f32 %v1396, %v1406
      %v1408 = vmul.f32 %v1397, %v1406
      %v1409 = vmul.f32 %v1398, %v1406
      %v1410 = vmul.f32 %v1399, %v1406
      %v1411 = vmul.f32 %v1400, %v1406
      %v1412 = vmul.f32 %v1401, %v1406
      %v1413 = vmul.f32 %v1402, %v1406
      %v1414 = vadd.f32 %v1389, %v1407
      %v1415 = vadd.f32 %v1390, %v1408
      %v1416 = vadd.f32 %v1391, %v1409
      %v1417 = vadd.f32 %v1392, %v1410
      %v1418 = vadd.f32 %v1393, %v1411
      %v1419 = vadd.f32 %v1394, %v1412
      %v1420 = vadd.f32 %v1395, %v1413
      %v1421 = vld [vmem:[%s690 + $0x3] sm:$0x7f]
      %v1422 = vld [vmem:[%s690 + $0x13] sm:$0x7f]
      %v1423 = vld [vmem:[%s690 + $0x23] sm:$0x7f]
      %v1424 = vld [vmem:[%s690 + $0x33] sm:$0x7f]
      %v1425 = vld [vmem:[%s690 + $0x43] sm:$0x7f]
      %v1426 = vld [vmem:[%s690 + $0x53] sm:$0x7f]
      %v1427 = vld [vmem:[%s690 + $0x63] sm:$0x7f]
      %v1428 = vlaneseq
      %v1429 = vshrl.u32 %v1428, 7
      %v1430 = vsub.s32 2, %v1429
      %v1431 = vrot.slane %v870, %v1430
      %v1432 = vmul.f32 %v1421, %v1431
      %v1433 = vmul.f32 %v1422, %v1431
      %v1434 = vmul.f32 %v1423, %v1431
      %v1435 = vmul.f32 %v1424, %v1431
      %v1436 = vmul.f32 %v1425, %v1431
      %v1437 = vmul.f32 %v1426, %v1431
      %v1438 = vmul.f32 %v1427, %v1431
      %v1439 = vadd.f32 %v1414, %v1432
      %v1440 = vadd.f32 %v1415, %v1433
      %v1441 = vadd.f32 %v1416, %v1434
      %v1442 = vadd.f32 %v1417, %v1435
      %v1443 = vadd.f32 %v1418, %v1436
      %v1444 = vadd.f32 %v1419, %v1437
      %v1445 = vadd.f32 %v1420, %v1438
      %v1446 = vld [vmem:[%s690 + $0x4] sm:$0x7f]
      %v1447 = vld [vmem:[%s690 + $0x14] sm:$0x7f]
      %v1448 = vld [vmem:[%s690 + $0x24] sm:$0x7f]
      %v1449 = vld [vmem:[%s690 + $0x34] sm:$0x7f]
      %v1450 = vld [vmem:[%s690 + $0x44] sm:$0x7f]
      %v1451 = vld [vmem:[%s690 + $0x54] sm:$0x7f]
      %v1452 = vld [vmem:[%s690 + $0x64] sm:$0x7f]
      %v1453 = vlaneseq
      %v1454 = vshrl.u32 %v1453, 7
      %v1455 = vsub.s32 3, %v1454
      %v1456 = vrot.slane %v870, %v1455
      %v1457 = vmul.f32 %v1446, %v1456
      %v1458 = vmul.f32 %v1447, %v1456
      %v1459 = vmul.f32 %v1448, %v1456
      %v1460 = vmul.f32 %v1449, %v1456
      %v1461 = vmul.f32 %v1450, %v1456
      %v1462 = vmul.f32 %v1451, %v1456
      %v1463 = vmul.f32 %v1452, %v1456
      %v1464 = vadd.f32 %v1439, %v1457
      %v1465 = vadd.f32 %v1440, %v1458
      %v1466 = vadd.f32 %v1441, %v1459
      %v1467 = vadd.f32 %v1442, %v1460
      %v1468 = vadd.f32 %v1443, %v1461
      %v1469 = vadd.f32 %v1444, %v1462
      %v1470 = vadd.f32 %v1445, %v1463
      %v1471 = vld [vmem:[%s690 + $0x5] sm:$0x7f]
      %v1472 = vld [vmem:[%s690 + $0x15] sm:$0x7f]
      %v1473 = vld [vmem:[%s690 + $0x25] sm:$0x7f]
      %v1474 = vld [vmem:[%s690 + $0x35] sm:$0x7f]
      %v1475 = vld [vmem:[%s690 + $0x45] sm:$0x7f]
      %v1476 = vld [vmem:[%s690 + $0x55] sm:$0x7f]
      %v1477 = vld [vmem:[%s690 + $0x65] sm:$0x7f]
      %v1478 = vlaneseq
      %v1479 = vshrl.u32 %v1478, 7
      %v1480 = vsub.s32 4, %v1479
      %v1481 = vrot.slane %v870, %v1480
      %v1482 = vmul.f32 %v1471, %v1481
      %v1483 = vmul.f32 %v1472, %v1481
      %v1484 = vmul.f32 %v1473, %v1481
      %v1485 = vmul.f32 %v1474, %v1481
      %v1486 = vmul.f32 %v1475, %v1481
      %v1487 = vmul.f32 %v1476, %v1481
      %v1488 = vmul.f32 %v1477, %v1481
      %v1489 = vadd.f32 %v1464, %v1482
      %v1490 = vadd.f32 %v1465, %v1483
      %v1491 = vadd.f32 %v1466, %v1484
      %v1492 = vadd.f32 %v1467, %v1485
      %v1493 = vadd.f32 %v1468, %v1486
      %v1494 = vadd.f32 %v1469, %v1487
      %v1495 = vadd.f32 %v1470, %v1488
      %v1496 = vadd.f32 %v1489, %v820
      %v1497 = vadd.f32 %v1490, %v820
      %v1498 = vadd.f32 %v1491, %v820
      %v1499 = vadd.f32 %v1492, %v820
      %v1500 = vadd.f32 %v1493, %v820
      %v1501 = vadd.f32 %v1494, %v820
      %v1502 = vadd.f32 %v1495, %v820
      %v1503 = vadd.f32 %v1496, 3.0
      %v1504 = vadd.f32 %v1497, 3.0
      %v1505 = vadd.f32 %v1498, 3.0
      %v1506 = vadd.f32 %v1499, 3.0
      %v1507 = vadd.f32 %v1500, 3.0
      %v1508 = vadd.f32 %v1501, 3.0
      %v1509 = vadd.f32 %v1502, 3.0
      %v1510 = vmax.f32 %v1503, 0.0
      %v1511 = vmax.f32 %v1504, 0.0
      %v1512 = vmax.f32 %v1505, 0.0
      %v1513 = vmax.f32 %v1506, 0.0
      %v1514 = vmax.f32 %v1507, 0.0
      %v1515 = vmax.f32 %v1508, 0.0
      %v1516 = vmax.f32 %v1509, 0.0
      %v1517 = vmin.f32 %v1510, 6.0
      %v1518 = vmin.f32 %v1511, 6.0
      %v1519 = vmin.f32 %v1512, 6.0
      %v1520 = vmin.f32 %v1513, 6.0
      %v1521 = vmin.f32 %v1514, 6.0
      %v1522 = vmin.f32 %v1515, 6.0
      %v1523 = vmin.f32 %v1516, 6.0
      %v1524 = vmul.f32 %v1517, 0.16666667
      %v1525 = vmul.f32 %v1518, 0.16666667
      %v1526 = vmul.f32 %v1519, 0.16666667
      %v1527 = vmul.f32 %v1520, 0.16666667
      %v1528 = vmul.f32 %v1521, 0.16666667
      %v1529 = vmul.f32 %v1522, 0.16666667
      %v1530 = vmul.f32 %v1523, 0.16666667
      %s1531 = scalar_lea.vmem %s170, 56
      %1532 = vst.msk [vmem:[%s1531] sm:$0x7f] %vm857, %v1524
      %1533 = vst.msk [vmem:[%s1531 + $0x8] sm:$0x7f] %vm857, %v1525
      %1534 = vst.msk [vmem:[%s1531 + $0x10] sm:$0x7f] %vm857, %v1526
      %1535 = vst.msk [vmem:[%s1531 + $0x18] sm:$0x7f] %vm857, %v1527
      %1536 = vst.msk [vmem:[%s1531 + $0x20] sm:$0x7f] %vm857, %v1528
      %1537 = vst.msk [vmem:[%s1531 + $0x28] sm:$0x7f] %vm857, %v1529
      %1538 = vst.msk [vmem:[%s1531 + $0x30] sm:$0x7f] %vm857, %v1530
      %p1539 = scmp.lt.s32.totalorder %s14, 1
      %s1540 = scalar_select %p1539, %s14, 1
      %s1541 = smul.addr %s1540, 14
      %s1542 = smul.addr %s1541, 8
      %s1543 = scalar_lea.vmem %s3, %s1542
      // Predicated region
      $region33: #{depthwise_convtranspose_hardsigmoid.1} parent=31 // pred_check
        %p1544 = pneg %p100
      $region34: #{depthwise_convtranspose_hardsigmoid.1} parent=31 // pred_check_branch
        %1546 = sbr.rel (%p1544) target = $region36
      $region35: #{depthwise_convtranspose_hardsigmoid.1} parent=31 // pred_region
        _
      $region36: #{depthwise_convtranspose_hardsigmoid.1} parent=31 // pred_fallthru
        _
    $region32: #{depthwise_convtranspose_hardsigmoid.1} parent=5 // pred_fallthru
      _
    %p1547 = scmp.le.s32.totalorder 2, %s9
    // Predicated region
    $region37: #{depthwise_convtranspose_hardsigmoid.1} parent=5 // pred_check
      %p1548 = pneg %p1547
    $region38: #{depthwise_convtranspose_hardsigmoid.1} parent=5 // pred_check_branch
      %1550 = sbr.rel (%p1548) target = $region40
    $region39: #{depthwise_convtranspose_hardsigmoid.1} parent=5 // pred_region
      %s1551 = ssub.s32 %s9, 2
      // Predicated region
      $region41: #{depthwise_convtranspose_hardsigmoid.1} parent=39 // pred_check
        %p1552 = pneg %p106
      $region42: #{depthwise_convtranspose_hardsigmoid.1} parent=39 // pred_check_branch
        %1554 = sbr.rel (%p1552) target = $region44
      $region43: #{depthwise_convtranspose_hardsigmoid.1} parent=39 // pred_region
        %p1555 = scmp.lt.s32.totalorder %s15, 1
        %s1556 = scalar_select %p1555, %s15, 1
        %s1557 = smul.addr %s1556, 14
        %s1558 = smul.addr %s1557, 8
        %s1559 = scalar_lea.vmem %s3, %s1558
      $region44: #{depthwise_convtranspose_hardsigmoid.1} parent=39 // pred_fallthru
        _
    $region40: #{depthwise_convtranspose_hardsigmoid.1} parent=5 // pred_fallthru
      _
  $region6: #{depthwise_convtranspose_hardsigmoid.1} parent=0 // loop_footer
    %s13 = sadd.s32 1, %s9
  $region7: #{depthwise_convtranspose_hardsigmoid.1} parent=0 // loop_footer_branch
    %8 = sbr.rel target = $region3
  $region8: #{depthwise_convtranspose_hardsigmoid.1} parent=0 // loop_exit
    _

</llo_original>
